<compile_context>
chip_gen: v7x
topology: tpu7x:2x2x1
jax: 0.10.0
libtpu: 0.0.40
codegen_flags: <defaults>
</compile_context>

<pallas_src>
import functools

import jax
import jax.numpy as jnp
from jax import lax
from jax.experimental import pallas as pl
from jax.experimental.pallas import tpu as pltpu

EPS_IN = 1e-3   # nn.InstanceNorm2d(eps=0.001)
EPS_BN = 1e-5   # nn.BatchNorm2d default eps


def _round_up(n, m):
    return ((n + m - 1) // m) * m


def _choose_batch_block(B, C, Cout, P_pad, target_bytes=1 << 20):
    """Largest divisor of B whose x block (Bblk*C, P_pad) stays near ~1 MiB and
    keeps the packed sublane dims multiples of 8 (or covers the full batch)."""
    def ok(b):
        return b == B or ((b * C) % 8 == 0 and (b * Cout) % 8 == 0)
    divisors = [b for b in range(1, B + 1) if B % b == 0 and ok(b)]
    if not divisors:
        return B
    fitting = [b for b in divisors if b * max(C, Cout) * P_pad * 4 <= target_bytes]
    return max(fitting) if fitting else min(divisors)


def _row_stats(h, p_true):
    """Per-row mean and biased variance over the first p_true lanes of (R, P_pad)."""
    p_pad = h.shape[-1]
    if p_true == p_pad:
        mu = jnp.mean(h, axis=-1, keepdims=True)
        d = h - mu
        var = jnp.mean(d * d, axis=-1, keepdims=True)
    else:
        valid = lax.broadcasted_iota(jnp.int32, h.shape, 1) < p_true
        inv_p = 1.0 / float(p_true)
        mu = jnp.sum(jnp.where(valid, h, 0.0), axis=-1, keepdims=True) * inv_p
        d = jnp.where(valid, h - mu, 0.0)
        var = jnp.sum(d * d, axis=-1, keepdims=True) * inv_p
    return mu, var


def _conv_rows(w, h):
    """(R_out, K) @ (K, P) -> (R_out, P). MXU once K >= 32, VPU MAC otherwise."""
    k = w.shape[1]
    if k >= 32:
        # f32 test data: HIGHEST keeps the check against the f32 reference
        # tight.  TODO(synk): production bf16 kernels should drop it.
        return jnp.dot(w, h, preferred_element_type=jnp.float32,
                       precision=lax.Precision.HIGHEST)
    acc = w[:, 0:1] * h[0:1, :]
    for r in range(1, k):
        acc = acc + w[:, r:r + 1] * h[r:r + 1, :]
    return acc


def _make_kernels(R_in, R_out, P_true, P_pad, use_bn, use_short_cut, has_sc_conv):
    """Kernel bodies for a static configuration; everything is 2-D (rows, P)."""

    def stage1(x, mu1, var1, s1, t1, w1, b1):
        """IN1 [+ BN1 affine] + ReLU + conv1 in sublane-packed (rows, P) form."""
        gain = lax.rsqrt(var1 + EPS_IN)                 # (R_in, 1)
        if use_bn:
            gain = gain * s1
            shift = t1 - mu1 * gain
        else:
            shift = -mu1 * gain
        y = jnp.maximum(x * gain + shift, 0.0)          # fully packed elementwise chain
        return _conv_rows(w1, y) + b1                   # (R_out, P_pad)

    def k_stats_x(x_ref, mu_ref, var_ref):
        mu, var = _row_stats(x_ref[...], P_true)
        mu_ref[...] = mu
        var_ref[...] = var

    def k_stats_h(x_ref, mu1_ref, var1_ref, s1_ref, t1_ref, w1_ref, b1_ref,
                  mu2_ref, var2_ref):
        h2 = stage1(x_ref[...], mu1_ref[...], var1_ref[...],
                    s1_ref[...], t1_ref[...], w1_ref[...], b1_ref[...])
        mu, var = _row_stats(h2, P_true)
        mu2_ref[...] = mu
        var2_ref[...] = var

    def k_apply(*refs):
        it = iter(refs)
        x_ref = next(it)
        if use_bn:
            mu1_ref = next(it); var1_ref = next(it)
            s1_ref = next(it); t1_ref = next(it)
        w1_ref = next(it); b1_ref = next(it)
        if use_bn:
            mu2_ref = next(it); var2_ref = next(it)
            s2_ref = next(it); t2_ref = next(it)
        w2_ref = next(it); b2_ref = next(it)
        o_ref = next(it)

        x = x_ref[...]                                  # (R_in, P_pad)
        if use_bn:
            h2 = stage1(x, mu1_ref[...], var1_ref[...],
                        s1_ref[...], t1_ref[...], w1_ref[...], b1_ref[...])
            gain2 = lax.rsqrt(var2_ref[...] + EPS_IN) * s2_ref[...]
            shift2 = t2_ref[...] - mu2_ref[...] * gain2
        else:
            mu1, var1 = _row_stats(x, P_true)
            h2 = stage1(x, mu1, var1, None, None, w1_ref[...], b1_ref[...])
            mu2, var2 = _row_stats(h2, P_true)
            gain2 = lax.rsqrt(var2 + EPS_IN)
            shift2 = -mu2 * gain2
        y2 = jnp.maximum(h2 * gain2 + shift2, 0.0)      # (R_out, P_pad), packed

        w2 = w2_ref[...]
        if use_short_cut and has_sc_conv:
            # Second conv and shortcut conv fused as one contraction [W2 | Ws].
            if R_out + R_in >= 32:
                out = jnp.dot(w2, jnp.concatenate([y2, x], axis=0),
                              preferred_element_type=jnp.float32,
                              precision=lax.Precision.HIGHEST)
            else:
                out = _conv_rows(w2[:, :R_out], y2) + _conv_rows(w2[:, R_out:], x)
        else:
            out = _conv_rows(w2, y2)
            if use_short_cut:
                out = out + x                           # identity shortcut (Cout == C)
        out = out + b2_ref[...]
        o_ref[...] = out.astype(o_ref.dtype)

    return k_stats_x, k_stats_h, k_apply


def init_pointcn_params(key, channels, out_channels=None, use_bn=True):
    """Deterministic synthetic parameters (w layout: (Cout, Cin))."""
    if out_channels is None:
        out_channels = channels
    ks = jax.random.split(key, 10)
    p = {
        'w1': 0.2 * jax.random.normal(ks[0], (out_channels, channels), jnp.float32),
        'b1': 0.05 * jax.random.normal(ks[1], (out_channels, 1), jnp.float32),
        'w2': 0.2 * jax.random.normal(ks[2], (out_channels, out_channels), jnp.float32),
        'b2': 0.05 * jax.random.normal(ks[3], (out_channels, 1), jnp.float32),
    }
    if use_bn:
        p['g1'] = 1.0 + 0.1 * jax.random.normal(ks[4], (channels, 1), jnp.float32)
        p['bt1'] = 0.1 * jax.random.normal(ks[5], (channels, 1), jnp.float32)
        p['g2'] = 1.0 + 0.1 * jax.random.normal(ks[6], (out_channels, 1), jnp.float32)
        p['bt2'] = 0.1 * jax.random.normal(ks[7], (out_channels, 1), jnp.float32)
    if out_channels != channels:
        p['ws'] = 0.2 * jax.random.normal(ks[8], (out_channels, channels), jnp.float32)
        p['bs'] = 0.05 * jax.random.normal(ks[9], (out_channels, 1), jnp.float32)
    return p


@functools.partial(jax.jit, static_argnames=('use_short_cut', 'use_bn', 'out_dtype'))
def pointcn_forward(x_nchw, params, use_short_cut=True, use_bn=True,
                    out_dtype=jnp.float32):
    """PointCN forward. x_nchw: (B, C, H, W) float32 -> (B, Cout, H, W)."""
    B, C, H, W = x_nchw.shape
    P = H * W
    P_pad = _round_up(P, 128)
    Cout = params['w1'].shape[0]
    has_sc_conv = use_short_cut and ('ws' in params)

    # NCHW -> packed (B*C, P) rows (pure reshape); pad the point axis so all
    # stores are lane-dense.  Pad columns never enter any statistic.
    x2d = x_nchw.astype(jnp.float32).reshape(B * C, P)
    if P_pad != P:
        x2d = jnp.pad(x2d, ((0, 0), (0, P_pad - P)))

    Bblk = _choose_batch_block(B, C, Cout, P_pad)
    nblk = B // Bblk
    R_in, R_out = Bblk * C, Bblk * Cout

    # Block-diagonal / row-tiled parameter forms so the whole kernel works on
    # sublane-packed (rows, P) tiles.  At real LMCNet sizes (C >= 128) Bblk
    # collapses to 1 and these are the plain dense weights.
    eye = jnp.eye(Bblk, dtype=jnp.float32)
    w1_bd = jnp.kron(eye, params['w1'].astype(jnp.float32))              # (R_out, R_in)
    b1_rows = jnp.tile(params['b1'].reshape(Cout, 1).astype(jnp.float32), (Bblk, 1))
    w2_bd = jnp.kron(eye, params['w2'].astype(jnp.float32))              # (R_out, R_out)
    b2_rows = jnp.tile(params['b2'].reshape(Cout, 1).astype(jnp.float32), (Bblk, 1))
    if has_sc_conv:
        ws_bd = jnp.kron(eye, params['ws'].astype(jnp.float32))          # (R_out, R_in)
        w2_bd = jnp.concatenate([w2_bd, ws_bd], axis=1)                  # fused [W2 | Ws]
        b2_rows = b2_rows + jnp.tile(
            params['bs'].reshape(Cout, 1).astype(jnp.float32), (Bblk, 1))

    k_stats_x, k_stats_h, k_apply = _make_kernels(
        R_in, R_out, P, P_pad, use_bn, use_short_cut, has_sc_conv)

    cparams = pltpu.CompilerParams(dimension_semantics=("parallel",),
                                   vmem_limit_bytes=32 * 1024 * 1024)

    x_spec = pl.BlockSpec((R_in, P_pad), lambda i: (i, 0))
    out_spec = pl.BlockSpec((R_out, P_pad), lambda i: (i, 0))
    stat_in_spec = pl.BlockSpec((R_in, 1), lambda i: (i, 0))
    stat_out_spec = pl.BlockSpec((R_out, 1), lambda i: (i, 0))

    def full_spec(a):
        return pl.BlockSpec(a.shape, lambda i, _n=a.ndim: (0,) * _n)

    out_shape = jax.ShapeDtypeStruct((B * Cout, P_pad), out_dtype)

    if use_bn:
        g1 = params['g1'].reshape(C, 1).astype(jnp.float32)
        bt1 = params['bt1'].reshape(C, 1).astype(jnp.float32)
        g2 = params['g2'].reshape(Cout, 1).astype(jnp.float32)
        bt2 = params['bt2'].reshape(Cout, 1).astype(jnp.float32)
        stat_c = jax.ShapeDtypeStruct((B * C, 1), jnp.float32)
        stat_o = jax.ShapeDtypeStruct((B * Cout, 1), jnp.float32)

        # Pass 1: per-(b, c) InstanceNorm statistics of x.
        mu1, var1 = pl.pallas_call(
            k_stats_x, grid=(nblk,),
            in_specs=[x_spec],
            out_specs=(stat_in_spec, stat_in_spec),
            out_shape=(stat_c, stat_c),
            compiler_params=cparams)(x2d)

        # Fold BN1 out of a second activation reduction: the IN output has zero
        # mean and biased variance var/(var+eps) per (b, c), so the BN batch
        # variance is a mean over B of tiny per-(b, c) scalars.
        v1 = var1.reshape(B, C)
        bn1_var = jnp.mean(v1 / (v1 + EPS_IN), axis=0).reshape(C, 1)
        s1_rows = jnp.tile(g1 * lax.rsqrt(bn1_var + EPS_BN), (Bblk, 1))   # (R_in, 1)
        t1_rows = jnp.tile(bt1, (Bblk, 1))

        # Pass 2: per-(b, c) IN statistics of h2 = conv1(ReLU(BN1(IN1 x)))
        # (h2 is recomputed per block; it never round-trips through HBM).
        mu2, var2 = pl.pallas_call(
            k_stats_h, grid=(nblk,),
            in_specs=[x_spec, stat_in_spec, stat_in_spec,
                      full_spec(s1_rows), full_spec(t1_rows),
                      full_spec(w1_bd), full_spec(b1_rows)],
            out_specs=(stat_out_spec, stat_out_spec),
            out_shape=(stat_o, stat_o),
            compiler_params=cparams)(
                x2d, mu1, var1, s1_rows, t1_rows, w1_bd, b1_rows)

        v2 = var2.reshape(B, Cout)
        bn2_var = jnp.mean(v2 / (v2 + EPS_IN), axis=0).reshape(Cout, 1)
        s2_rows = jnp.tile(g2 * lax.rsqrt(bn2_var + EPS_BN), (Bblk, 1))   # (R_out, 1)
        t2_rows = jnp.tile(bt2, (Bblk, 1))

        # Pass 3: apply the full chain + shortcut.
        inputs = [x2d, mu1, var1, s1_rows, t1_rows, w1_bd, b1_rows,
                  mu2, var2, s2_rows, t2_rows, w2_bd, b2_rows]
        in_specs = [x_spec, stat_in_spec, stat_in_spec,
                    full_spec(s1_rows), full_spec(t1_rows),
                    full_spec(w1_bd), full_spec(b1_rows),
                    stat_out_spec, stat_out_spec,
                    full_spec(s2_rows), full_spec(t2_rows),
                    full_spec(w2_bd), full_spec(b2_rows)]
        out2d = pl.pallas_call(
            k_apply, grid=(nblk,),
            in_specs=in_specs, out_specs=out_spec, out_shape=out_shape,
            compiler_params=cparams)(*inputs)
    else:
        # No BatchNorm -> no cross-batch coupling: one fused call per batch block.
        out2d = pl.pallas_call(
            k_apply, grid=(nblk,),
            in_specs=[x_spec, full_spec(w1_bd), full_spec(b1_rows),
                      full_spec(w2_bd), full_spec(b2_rows)],
            out_specs=out_spec, out_shape=out_shape,
            compiler_params=cparams)(x2d, w1_bd, b1_rows, w2_bd, b2_rows)

    # TODO(synk): BatchNorm running_mean/running_var buffer updates (a PyTorch
    # training-time side effect) are not reproduced; only the forward math is.
    # TODO(synk): for very large point counts, additionally tile the P axis in
    # the stats passes (scratch accumulation over an 'arbitrary' grid axis).
    if P_pad != P:
        out2d = out2d[:, :P]
    return out2d.reshape(B, Cout, H, W)


def pointcn_reference(x, p, use_short_cut=True, use_bn=True):
    """Pure-JAX NCHW reference mirroring the PyTorch module (training-mode BN,
    full reductions) - validates the IN->BN fold and the masked padded stats."""
    def inorm(h):
        mu = h.mean(axis=(2, 3), keepdims=True)
        var = ((h - mu) ** 2).mean(axis=(2, 3), keepdims=True)
        return (h - mu) / jnp.sqrt(var + EPS_IN)

    def bnorm(h, g, b):
        mu = h.mean(axis=(0, 2, 3), keepdims=True)
        var = ((h - mu) ** 2).mean(axis=(0, 2, 3), keepdims=True)
        return (h - mu) / jnp.sqrt(var + EPS_BN) * g.reshape(1, -1, 1, 1) \
            + b.reshape(1, -1, 1, 1)

    def conv1x1(h, w, bias):
        return jnp.einsum('oc,bchw->bohw', w, h,
                          precision=lax.Precision.HIGHEST) + bias.reshape(1, -1, 1, 1)

    h = inorm(x)
    if use_bn:
        h = bnorm(h, p['g1'], p['bt1'])
    h = conv1x1(jnp.maximum(h, 0.0), p['w1'], p['b1'])
    h = inorm(h)
    if use_bn:
        h = bnorm(h, p['g2'], p['bt2'])
    h = conv1x1(jnp.maximum(h, 0.0), p['w2'], p['b2'])
    if use_short_cut:
        if 'ws' in p:
            h = h + conv1x1(x, p['ws'], p['bs'])
        else:
            h = h + x
    return h


if __name__ == "__main__":
    key = jax.random.PRNGKey(0)
    kx, kp1, kp2, kp3, kp4, kx2 = jax.random.split(key, 6)

    def check(x, params, use_bn, use_short_cut, exp_cout,
              out_dtype=jnp.float32, rtol=5e-4, atol=5e-4):
        out = pointcn_forward(x, params, use_short_cut=use_short_cut,
                              use_bn=use_bn, out_dtype=out_dtype)
        jax.block_until_ready(out)
        b, _, h, w = x.shape
        assert out.shape == (b, exp_cout, h, w), out.shape
        assert out.dtype == out_dtype, out.dtype
        ref = pointcn_reference(x, params, use_short_cut=use_short_cut, use_bn=use_bn)
        out_f = out.astype(jnp.float32)
        err = float(jnp.max(jnp.abs(out_f - ref)))
        assert jnp.allclose(out_f, ref, rtol=rtol, atol=atol), err

    B, C, H, W = 2, 4, 16, 16
    x = jax.random.normal(kx, (B, C, H, W), jnp.float32)

    # 1) BN on, conv shortcut (out_channels != channels).
    p1 = init_pointcn_params(kp1, channels=C, out_channels=8)
    check(x, p1, True, True, 8)
    # 2) BN on, identity shortcut (out_channels == channels).
    p2 = init_pointcn_params(kp2, channels=C, out_channels=C)
    check(x, p2, True, True, C)
    # 3) BN off: single fused call over the batch-blocked grid.
    p3 = init_pointcn_params(kp3, channels=C, out_channels=8, use_bn=False)
    check(x, p3, False, True, 8)
    # 4) MXU path + fused [W2 | Ws] contraction (channel counts >= 32).
    p4 = init_pointcn_params(kp4, channels=32, out_channels=48)
    x4 = jax.random.normal(kx2, (2, 32, 16, 16), jnp.float32)
    check(x4, p4, True, True, 48, rtol=2e-3, atol=2e-3)
    # 5) Point count not a multiple of 128: pad + masked statistics.
    x5 = jax.random.normal(kx, (2, 4, 10, 10), jnp.float32)
    check(x5, p1, True, True, 8)
    # 6) bf16 output (halves writeback bytes); loose tolerance for the cast.
    check(x, p1, True, True, 8, out_dtype=jnp.bfloat16, rtol=2e-2, atol=2e-2)

    print("KERNEL_OK")
</pallas_src>

<mosaic_0001>
module attributes {stable_mosaic.version = 11 : i64} {
  func.func @k_stats_x(%arg0: i32, %arg1: memref<8x256xf32, #tpu.memory_space<vmem>>, %arg2: memref<8x1xf32, #tpu.memory_space<vmem>>, %arg3: memref<8x1xf32, #tpu.memory_space<vmem>>) attributes {dimension_semantics = [#tpu.dimension_semantics<parallel>], iteration_bounds = array<i64: 1>, scalar_prefetch = 0 : i64, scratch_operands = 0 : i64, tpu.core_type = #tpu.core_type<tc>, window_params = [{transform_indices = @transform_0, window_bounds = array<i64: 8, 256>}, {transform_indices = @transform_1, window_bounds = array<i64: 8, 1>}, {transform_indices = @transform_2, window_bounds = array<i64: 8, 1>}]} {
    %c0 = arith.constant 0 : index
    %c0_0 = arith.constant 0 : index
    %0 = vector.load %arg1[%c0, %c0_0] : memref<8x256xf32, #tpu.memory_space<vmem>>, vector<8x256xf32>
    %cst = arith.constant dense<0.000000e+00> : vector<8xf32>
    %1 = vector.multi_reduction <add>, %0, %cst [1] : vector<8x256xf32> to vector<8xf32>
    %2 = vector.shape_cast %1 : vector<8xf32> to vector<8x1xf32>
    %cst_1 = arith.constant 2.560000e+02 : f32
    %3 = vector.broadcast %cst_1 : f32 to vector<8x1xf32>
    %4 = arith.divf %2, %3 : vector<8x1xf32>
    %5 = vector.broadcast %4 : vector<8x1xf32> to vector<8x256xf32>
    %6 = arith.subf %0, %5 : vector<8x256xf32>
    %7 = arith.mulf %6, %6 : vector<8x256xf32>
    %cst_2 = arith.constant dense<0.000000e+00> : vector<8xf32>
    %8 = vector.multi_reduction <add>, %7, %cst_2 [1] : vector<8x256xf32> to vector<8xf32>
    %9 = vector.shape_cast %8 : vector<8xf32> to vector<8x1xf32>
    %cst_3 = arith.constant 2.560000e+02 : f32
    %10 = vector.broadcast %cst_3 : f32 to vector<8x1xf32>
    %11 = arith.divf %9, %10 : vector<8x1xf32>
    %c0_4 = arith.constant 0 : index
    %c0_5 = arith.constant 0 : index
    %12 = vector.load %arg2[%c0_4, %c0_5] : memref<8x1xf32, #tpu.memory_space<vmem>>, vector<8x1xf32>
    tpu.vector_store %arg2[%c0_4, %c0_5], %4 {strides = array<i32>} : memref<8x1xf32, #tpu.memory_space<vmem>>, vector<8x1xf32>,
    %c0_6 = arith.constant 0 : index
    %c0_7 = arith.constant 0 : index
    %13 = vector.load %arg3[%c0_6, %c0_7] : memref<8x1xf32, #tpu.memory_space<vmem>>, vector<8x1xf32>
    tpu.vector_store %arg3[%c0_6, %c0_7], %11 {strides = array<i32>} : memref<8x1xf32, #tpu.memory_space<vmem>>, vector<8x1xf32>,
    return
  }
  func.func @transform_0(%arg0: i32) -> (i32, i32) {
    %c0_i32 = arith.constant 0 : i32
    %c0_i32_0 = arith.constant 0 : i32
    return %arg0, %c0_i32 : i32, i32
  }
  func.func @transform_1(%arg0: i32) -> (i32, i32) {
    %c0_i32 = arith.constant 0 : i32
    %c0_i32_0 = arith.constant 0 : i32
    return %arg0, %c0_i32 : i32, i32
  }
  func.func @transform_2(%arg0: i32) -> (i32, i32) {
    %c0_i32 = arith.constant 0 : i32
    %c0_i32_0 = arith.constant 0 : i32
    return %arg0, %c0_i32 : i32, i32
  }
}

module attributes {stable_mosaic.version = 11 : i64} {
  func.func @k_stats_h(%arg0: i32, %arg1: memref<8x256xf32, #tpu.memory_space<vmem>>, %arg2: memref<8x1xf32, #tpu.memory_space<vmem>>, %arg3: memref<8x1xf32, #tpu.memory_space<vmem>>, %arg4: memref<8x1xf32, #tpu.memory_space<vmem>>, %arg5: memref<8x1xf32, #tpu.memory_space<vmem>>, %arg6: memref<16x8xf32, #tpu.memory_space<vmem>>, %arg7: memref<16x1xf32, #tpu.memory_space<vmem>>, %arg8: memref<16x1xf32, #tpu.memory_space<vmem>>, %arg9: memref<16x1xf32, #tpu.memory_space<vmem>>) attributes {dimension_semantics = [#tpu.dimension_semantics<parallel>], iteration_bounds = array<i64: 1>, scalar_prefetch = 0 : i64, scratch_operands = 0 : i64, tpu.core_type = #tpu.core_type<tc>, window_params = [{transform_indices = @transform_0, window_bounds = array<i64: 8, 256>}, {transform_indices = @transform_1, window_bounds = array<i64: 8, 1>}, {transform_indices = @transform_2, window_bounds = array<i64: 8, 1>}, {pipeline_mode = #tpu.pipeline_mode<synchronous>, transform_indices = @transform_3, window_bounds = array<i64: 8, 1>}, {pipeline_mode = #tpu.pipeline_mode<synchronous>, transform_indices = @transform_4, window_bounds = array<i64: 8, 1>}, {pipeline_mode = #tpu.pipeline_mode<synchronous>, transform_indices = @transform_5, window_bounds = array<i64: 16, 8>}, {pipeline_mode = #tpu.pipeline_mode<synchronous>, transform_indices = @transform_6, window_bounds = array<i64: 16, 1>}, {transform_indices = @transform_7, window_bounds = array<i64: 16, 1>}, {transform_indices = @transform_8, window_bounds = array<i64: 16, 1>}]} {
    %c0 = arith.constant 0 : index
    %c0_0 = arith.constant 0 : index
    %0 = vector.load %arg1[%c0, %c0_0] : memref<8x256xf32, #tpu.memory_space<vmem>>, vector<8x256xf32>
    %c0_1 = arith.constant 0 : index
    %c0_2 = arith.constant 0 : index
    %1 = vector.load %arg2[%c0_1, %c0_2] : memref<8x1xf32, #tpu.memory_space<vmem>>, vector<8x1xf32>
    %c0_3 = arith.constant 0 : index
    %c0_4 = arith.constant 0 : index
    %2 = vector.load %arg3[%c0_3, %c0_4] : memref<8x1xf32, #tpu.memory_space<vmem>>, vector<8x1xf32>
    %c0_5 = arith.constant 0 : index
    %c0_6 = arith.constant 0 : index
    %3 = vector.load %arg4[%c0_5, %c0_6] : memref<8x1xf32, #tpu.memory_space<vmem>>, vector<8x1xf32>
    %c0_7 = arith.constant 0 : index
    %c0_8 = arith.constant 0 : index
    %4 = vector.load %arg5[%c0_7, %c0_8] : memref<8x1xf32, #tpu.memory_space<vmem>>, vector<8x1xf32>
    %c0_9 = arith.constant 0 : index
    %c0_10 = arith.constant 0 : index
    %5 = vector.load %arg6[%c0_9, %c0_10] : memref<16x8xf32, #tpu.memory_space<vmem>>, vector<16x8xf32>
    %c0_11 = arith.constant 0 : index
    %c0_12 = arith.constant 0 : index
    %6 = vector.load %arg7[%c0_11, %c0_12] : memref<16x1xf32, #tpu.memory_space<vmem>>, vector<16x1xf32>
    %cst = arith.constant 1.000000e-03 : f32
    %7 = vector.broadcast %cst : f32 to vector<8x1xf32>
    %8 = arith.addf %2, %7 : vector<8x1xf32>
    %9 = math.rsqrt %8 : vector<8x1xf32>
    %10 = arith.mulf %9, %3 : vector<8x1xf32>
    %11 = arith.mulf %1, %10 : vector<8x1xf32>
    %12 = arith.subf %4, %11 : vector<8x1xf32>
    %13 = vector.broadcast %10 : vector<8x1xf32> to vector<8x256xf32>
    %14 = arith.mulf %0, %13 : vector<8x256xf32>
    %15 = vector.broadcast %12 : vector<8x1xf32> to vector<8x256xf32>
    %16 = arith.addf %14, %15 : vector<8x256xf32>
    %cst_13 = arith.constant 0.000000e+00 : f32
    %17 = vector.broadcast %cst_13 : f32 to vector<8x256xf32>
    %18 = arith.maximumf %16, %17 : vector<8x256xf32>
    %19 = vector.extract_strided_slice %5 {offsets = [0, 0], sizes = [16, 1], strides = [1, 1]} : vector<16x8xf32> to vector<16x1xf32>
    %20 = vector.extract_strided_slice %18 {offsets = [0, 0], sizes = [1, 256], strides = [1, 1]} : vector<8x256xf32> to vector<1x256xf32>
    %21 = vector.broadcast %19 : vector<16x1xf32> to vector<16x256xf32>
    %22 = vector.broadcast %20 : vector<1x256xf32> to vector<16x256xf32>
    %23 = arith.mulf %21, %22 : vector<16x256xf32>
    %24 = vector.extract_strided_slice %5 {offsets = [0, 1], sizes = [16, 1], strides = [1, 1]} : vector<16x8xf32> to vector<16x1xf32>
    %25 = vector.extract_strided_slice %18 {offsets = [1, 0], sizes = [1, 256], strides = [1, 1]} : vector<8x256xf32> to vector<1x256xf32>
    %26 = vector.broadcast %24 : vector<16x1xf32> to vector<16x256xf32>
    %27 = vector.broadcast %25 : vector<1x256xf32> to vector<16x256xf32>
    %28 = arith.mulf %26, %27 : vector<16x256xf32>
    %29 = arith.addf %23, %28 : vector<16x256xf32>
    %30 = vector.extract_strided_slice %5 {offsets = [0, 2], sizes = [16, 1], strides = [1, 1]} : vector<16x8xf32> to vector<16x1xf32>
    %31 = vector.extract_strided_slice %18 {offsets = [2, 0], sizes = [1, 256], strides = [1, 1]} : vector<8x256xf32> to vector<1x256xf32>
    %32 = vector.broadcast %30 : vector<16x1xf32> to vector<16x256xf32>
    %33 = vector.broadcast %31 : vector<1x256xf32> to vector<16x256xf32>
    %34 = arith.mulf %32, %33 : vector<16x256xf32>
    %35 = arith.addf %29, %34 : vector<16x256xf32>
    %36 = vector.extract_strided_slice %5 {offsets = [0, 3], sizes = [16, 1], strides = [1, 1]} : vector<16x8xf32> to vector<16x1xf32>
    %37 = vector.extract_strided_slice %18 {offsets = [3, 0], sizes = [1, 256], strides = [1, 1]} : vector<8x256xf32> to vector<1x256xf32>
    %38 = vector.broadcast %36 : vector<16x1xf32> to vector<16x256xf32>
    %39 = vector.broadcast %37 : vector<1x256xf32> to vector<16x256xf32>
    %40 = arith.mulf %38, %39 : vector<16x256xf32>
    %41 = arith.addf %35, %40 : vector<16x256xf32>
    %42 = vector.extract_strided_slice %5 {offsets = [0, 4], sizes = [16, 1], strides = [1, 1]} : vector<16x8xf32> to vector<16x1xf32>
    %43 = vector.extract_strided_slice %18 {offsets = [4, 0], sizes = [1, 256], strides = [1, 1]} : vector<8x256xf32> to vector<1x256xf32>
    %44 = vector.broadcast %42 : vector<16x1xf32> to vector<16x256xf32>
    %45 = vector.broadcast %43 : vector<1x256xf32> to vector<16x256xf32>
    %46 = arith.mulf %44, %45 : vector<16x256xf32>
    %47 = arith.addf %41, %46 : vector<16x256xf32>
    %48 = vector.extract_strided_slice %5 {offsets = [0, 5], sizes = [16, 1], strides = [1, 1]} : vector<16x8xf32> to vector<16x1xf32>
    %49 = vector.extract_strided_slice %18 {offsets = [5, 0], sizes = [1, 256], strides = [1, 1]} : vector<8x256xf32> to vector<1x256xf32>
    %50 = vector.broadcast %48 : vector<16x1xf32> to vector<16x256xf32>
    %51 = vector.broadcast %49 : vector<1x256xf32> to vector<16x256xf32>
    %52 = arith.mulf %50, %51 : vector<16x256xf32>
    %53 = arith.addf %47, %52 : vector<16x256xf32>
    %54 = vector.extract_strided_slice %5 {offsets = [0, 6], sizes = [16, 1], strides = [1, 1]} : vector<16x8xf32> to vector<16x1xf32>
    %55 = vector.extract_strided_slice %18 {offsets = [6, 0], sizes = [1, 256], strides = [1, 1]} : vector<8x256xf32> to vector<1x256xf32>
    %56 = vector.broadcast %54 : vector<16x1xf32> to vector<16x256xf32>
    %57 = vector.broadcast %55 : vector<1x256xf32> to vector<16x256xf32>
    %58 = arith.mulf %56, %57 : vector<16x256xf32>
    %59 = arith.addf %53, %58 : vector<16x256xf32>
    %60 = vector.extract_strided_slice %5 {offsets = [0, 7], sizes = [16, 1], strides = [1, 1]} : vector<16x8xf32> to vector<16x1xf32>
    %61 = vector.extract_strided_slice %18 {offsets = [7, 0], sizes = [1, 256], strides = [1, 1]} : vector<8x256xf32> to vector<1x256xf32>
    %62 = vector.broadcast %60 : vector<16x1xf32> to vector<16x256xf32>
    %63 = vector.broadcast %61 : vector<1x256xf32> to vector<16x256xf32>
    %64 = arith.mulf %62, %63 : vector<16x256xf32>
    %65 = arith.addf %59, %64 : vector<16x256xf32>
    %66 = vector.broadcast %6 : vector<16x1xf32> to vector<16x256xf32>
    %67 = arith.addf %65, %66 : vector<16x256xf32>
    %cst_14 = arith.constant dense<0.000000e+00> : vector<16xf32>
    %68 = vector.multi_reduction <add>, %67, %cst_14 [1] : vector<16x256xf32> to vector<16xf32>
    %69 = vector.shape_cast %68 : vector<16xf32> to vector<16x1xf32>
    %cst_15 = arith.constant 2.560000e+02 : f32
    %70 = vector.broadcast %cst_15 : f32 to vector<16x1xf32>
    %71 = arith.divf %69, %70 : vector<16x1xf32>
    %72 = vector.broadcast %71 : vector<16x1xf32> to vector<16x256xf32>
    %73 = arith.subf %67, %72 : vector<16x256xf32>
    %74 = arith.mulf %73, %73 : vector<16x256xf32>
    %cst_16 = arith.constant dense<0.000000e+00> : vector<16xf32>
    %75 = vector.multi_reduction <add>, %74, %cst_16 [1] : vector<16x256xf32> to vector<16xf32>
    %76 = vector.shape_cast %75 : vector<16xf32> to vector<16x1xf32>
    %cst_17 = arith.constant 2.560000e+02 : f32
    %77 = vector.broadcast %cst_17 : f32 to vector<16x1xf32>
    %78 = arith.divf %76, %77 : vector<16x1xf32>
    %c0_18 = arith.constant 0 : index
    %c0_19 = arith.constant 0 : index
    %79 = vector.load %arg8[%c0_18, %c0_19] : memref<16x1xf32, #tpu.memory_space<vmem>>, vector<16x1xf32>
    tpu.vector_store %arg8[%c0_18, %c0_19], %71 {strides = array<i32>} : memref<16x1xf32, #tpu.memory_space<vmem>>, vector<16x1xf32>,
    %c0_20 = arith.constant 0 : index
    %c0_21 = arith.constant 0 : index
    %80 = vector.load %arg9[%c0_20, %c0_21] : memref<16x1xf32, #tpu.memory_space<vmem>>, vector<16x1xf32>
    tpu.vector_store %arg9[%c0_20, %c0_21], %78 {strides = array<i32>} : memref<16x1xf32, #tpu.memory_space<vmem>>, vector<16x1xf32>,
    return
  }
  func.func @transform_0(%arg0: i32) -> (i32, i32) {
    %c0_i32 = arith.constant 0 : i32
    %c0_i32_0 = arith.constant 0 : i32
    return %arg0, %c0_i32 : i32, i32
  }
  func.func @transform_1(%arg0: i32) -> (i32, i32) {
    %c0_i32 = arith.constant 0 : i32
    %c0_i32_0 = arith.constant 0 : i32
    return %arg0, %c0_i32 : i32, i32
  }
  func.func @transform_2(%arg0: i32) -> (i32, i32) {
    %c0_i32 = arith.constant 0 : i32
    %c0_i32_0 = arith.constant 0 : i32
    return %arg0, %c0_i32 : i32, i32
  }
  func.func @transform_3(%arg0: i32) -> (i32, i32) {
    %c0_i32 = arith.constant 0 : i32
    %c0_i32_0 = arith.constant 0 : i32
    %c0_i32_1 = arith.constant 0 : i32
    return %c0_i32, %c0_i32_0 : i32, i32
  }
  func.func @transform_4(%arg0: i32) -> (i32, i32) {
    %c0_i32 = arith.constant 0 : i32
    %c0_i32_0 = arith.constant 0 : i32
    %c0_i32_1 = arith.constant 0 : i32
    return %c0_i32, %c0_i32_0 : i32, i32
  }
  func.func @transform_5(%arg0: i32) -> (i32, i32) {
    %c0_i32 = arith.constant 0 : i32
    %c0_i32_0 = arith.constant 0 : i32
    %c0_i32_1 = arith.constant 0 : i32
    return %c0_i32, %c0_i32_0 : i32, i32
  }
  func.func @transform_6(%arg0: i32) -> (i32, i32) {
    %c0_i32 = arith.constant 0 : i32
    %c0_i32_0 = arith.constant 0 : i32
    %c0_i32_1 = arith.constant 0 : i32
    return %c0_i32, %c0_i32_0 : i32, i32
  }
  func.func @transform_7(%arg0: i32) -> (i32, i32) {
    %c0_i32 = arith.constant 0 : i32
    %c0_i32_0 = arith.constant 0 : i32
    return %arg0, %c0_i32 : i32, i32
  }
  func.func @transform_8(%arg0: i32) -> (i32, i32) {
    %c0_i32 = arith.constant 0 : i32
    %c0_i32_0 = arith.constant 0 : i32
    return %arg0, %c0_i32 : i32, i32
  }
}

module attributes {stable_mosaic.version = 11 : i64} {
  func.func @k_apply(%arg0: i32, %arg1: memref<8x256xf32, #tpu.memory_space<vmem>>, %arg2: memref<8x1xf32, #tpu.memory_space<vmem>>, %arg3: memref<8x1xf32, #tpu.memory_space<vmem>>, %arg4: memref<8x1xf32, #tpu.memory_space<vmem>>, %arg5: memref<8x1xf32, #tpu.memory_space<vmem>>, %arg6: memref<16x8xf32, #tpu.memory_space<vmem>>, %arg7: memref<16x1xf32, #tpu.memory_space<vmem>>, %arg8: memref<16x1xf32, #tpu.memory_space<vmem>>, %arg9: memref<16x1xf32, #tpu.memory_space<vmem>>, %arg10: memref<16x1xf32, #tpu.memory_space<vmem>>, %arg11: memref<16x1xf32, #tpu.memory_space<vmem>>, %arg12: memref<16x24xf32, #tpu.memory_space<vmem>>, %arg13: memref<16x1xf32, #tpu.memory_space<vmem>>, %arg14: memref<16x256xf32, #tpu.memory_space<vmem>>) attributes {dimension_semantics = [#tpu.dimension_semantics<parallel>], iteration_bounds = array<i64: 1>, scalar_prefetch = 0 : i64, scratch_operands = 0 : i64, tpu.core_type = #tpu.core_type<tc>, window_params = [{transform_indices = @transform_0, window_bounds = array<i64: 8, 256>}, {transform_indices = @transform_1, window_bounds = array<i64: 8, 1>}, {transform_indices = @transform_2, window_bounds = array<i64: 8, 1>}, {pipeline_mode = #tpu.pipeline_mode<synchronous>, transform_indices = @transform_3, window_bounds = array<i64: 8, 1>}, {pipeline_mode = #tpu.pipeline_mode<synchronous>, transform_indices = @transform_4, window_bounds = array<i64: 8, 1>}, {pipeline_mode = #tpu.pipeline_mode<synchronous>, transform_indices = @transform_5, window_bounds = array<i64: 16, 8>}, {pipeline_mode = #tpu.pipeline_mode<synchronous>, transform_indices = @transform_6, window_bounds = array<i64: 16, 1>}, {transform_indices = @transform_7, window_bounds = array<i64: 16, 1>}, {transform_indices = @transform_8, window_bounds = array<i64: 16, 1>}, {pipeline_mode = #tpu.pipeline_mode<synchronous>, transform_indices = @transform_9, window_bounds = array<i64: 16, 1>}, {pipeline_mode = #tpu.pipeline_mode<synchronous>, transform_indices = @transform_10, window_bounds = array<i64: 16, 1>}, {pipeline_mode = #tpu.pipeline_mode<synchronous>, transform_indices = @transform_11, window_bounds = array<i64: 16, 24>}, {pipeline_mode = #tpu.pipeline_mode<synchronous>, transform_indices = @transform_12, window_bounds = array<i64: 16, 1>}, {transform_indices = @transform_13, window_bounds = array<i64: 16, 256>}]} {
    %c0 = arith.constant 0 : index
    %c0_0 = arith.constant 0 : index
    %0 = vector.load %arg1[%c0, %c0_0] : memref<8x256xf32, #tpu.memory_space<vmem>>, vector<8x256xf32>
    %c0_1 = arith.constant 0 : index
    %c0_2 = arith.constant 0 : index
    %1 = vector.load %arg2[%c0_1, %c0_2] : memref<8x1xf32, #tpu.memory_space<vmem>>, vector<8x1xf32>
    %c0_3 = arith.constant 0 : index
    %c0_4 = arith.constant 0 : index
    %2 = vector.load %arg3[%c0_3, %c0_4] : memref<8x1xf32, #tpu.memory_space<vmem>>, vector<8x1xf32>
    %c0_5 = arith.constant 0 : index
    %c0_6 = arith.constant 0 : index
    %3 = vector.load %arg4[%c0_5, %c0_6] : memref<8x1xf32, #tpu.memory_space<vmem>>, vector<8x1xf32>
    %c0_7 = arith.constant 0 : index
    %c0_8 = arith.constant 0 : index
    %4 = vector.load %arg5[%c0_7, %c0_8] : memref<8x1xf32, #tpu.memory_space<vmem>>, vector<8x1xf32>
    %c0_9 = arith.constant 0 : index
    %c0_10 = arith.constant 0 : index
    %5 = vector.load %arg6[%c0_9, %c0_10] : memref<16x8xf32, #tpu.memory_space<vmem>>, vector<16x8xf32>
    %c0_11 = arith.constant 0 : index
    %c0_12 = arith.constant 0 : index
    %6 = vector.load %arg7[%c0_11, %c0_12] : memref<16x1xf32, #tpu.memory_space<vmem>>, vector<16x1xf32>
    %cst = arith.constant 1.000000e-03 : f32
    %7 = vector.broadcast %cst : f32 to vector<8x1xf32>
    %8 = arith.addf %2, %7 : vector<8x1xf32>
    %9 = math.rsqrt %8 : vector<8x1xf32>
    %10 = arith.mulf %9, %3 : vector<8x1xf32>
    %11 = arith.mulf %1, %10 : vector<8x1xf32>
    %12 = arith.subf %4, %11 : vector<8x1xf32>
    %13 = vector.broadcast %10 : vector<8x1xf32> to vector<8x256xf32>
    %14 = arith.mulf %0, %13 : vector<8x256xf32>
    %15 = vector.broadcast %12 : vector<8x1xf32> to vector<8x256xf32>
    %16 = arith.addf %14, %15 : vector<8x256xf32>
    %cst_13 = arith.constant 0.000000e+00 : f32
    %17 = vector.broadcast %cst_13 : f32 to vector<8x256xf32>
    %18 = arith.maximumf %16, %17 : vector<8x256xf32>
    %19 = vector.extract_strided_slice %5 {offsets = [0, 0], sizes = [16, 1], strides = [1, 1]} : vector<16x8xf32> to vector<16x1xf32>
    %20 = vector.extract_strided_slice %18 {offsets = [0, 0], sizes = [1, 256], strides = [1, 1]} : vector<8x256xf32> to vector<1x256xf32>
    %21 = vector.broadcast %19 : vector<16x1xf32> to vector<16x256xf32>
    %22 = vector.broadcast %20 : vector<1x256xf32> to vector<16x256xf32>
    %23 = arith.mulf %21, %22 : vector<16x256xf32>
    %24 = vector.extract_strided_slice %5 {offsets = [0, 1], sizes = [16, 1], strides = [1, 1]} : vector<16x8xf32> to vector<16x1xf32>
    %25 = vector.extract_strided_slice %18 {offsets = [1, 0], sizes = [1, 256], strides = [1, 1]} : vector<8x256xf32> to vector<1x256xf32>
    %26 = vector.broadcast %24 : vector<16x1xf32> to vector<16x256xf32>
    %27 = vector.broadcast %25 : vector<1x256xf32> to vector<16x256xf32>
    %28 = arith.mulf %26, %27 : vector<16x256xf32>
    %29 = arith.addf %23, %28 : vector<16x256xf32>
    %30 = vector.extract_strided_slice %5 {offsets = [0, 2], sizes = [16, 1], strides = [1, 1]} : vector<16x8xf32> to vector<16x1xf32>
    %31 = vector.extract_strided_slice %18 {offsets = [2, 0], sizes = [1, 256], strides = [1, 1]} : vector<8x256xf32> to vector<1x256xf32>
    %32 = vector.broadcast %30 : vector<16x1xf32> to vector<16x256xf32>
    %33 = vector.broadcast %31 : vector<1x256xf32> to vector<16x256xf32>
    %34 = arith.mulf %32, %33 : vector<16x256xf32>
    %35 = arith.addf %29, %34 : vector<16x256xf32>
    %36 = vector.extract_strided_slice %5 {offsets = [0, 3], sizes = [16, 1], strides = [1, 1]} : vector<16x8xf32> to vector<16x1xf32>
    %37 = vector.extract_strided_slice %18 {offsets = [3, 0], sizes = [1, 256], strides = [1, 1]} : vector<8x256xf32> to vector<1x256xf32>
    %38 = vector.broadcast %36 : vector<16x1xf32> to vector<16x256xf32>
    %39 = vector.broadcast %37 : vector<1x256xf32> to vector<16x256xf32>
    %40 = arith.mulf %38, %39 : vector<16x256xf32>
    %41 = arith.addf %35, %40 : vector<16x256xf32>
    %42 = vector.extract_strided_slice %5 {offsets = [0, 4], sizes = [16, 1], strides = [1, 1]} : vector<16x8xf32> to vector<16x1xf32>
    %43 = vector.extract_strided_slice %18 {offsets = [4, 0], sizes = [1, 256], strides = [1, 1]} : vector<8x256xf32> to vector<1x256xf32>
    %44 = vector.broadcast %42 : vector<16x1xf32> to vector<16x256xf32>
    %45 = vector.broadcast %43 : vector<1x256xf32> to vector<16x256xf32>
    %46 = arith.mulf %44, %45 : vector<16x256xf32>
    %47 = arith.addf %41, %46 : vector<16x256xf32>
    %48 = vector.extract_strided_slice %5 {offsets = [0, 5], sizes = [16, 1], strides = [1, 1]} : vector<16x8xf32> to vector<16x1xf32>
    %49 = vector.extract_strided_slice %18 {offsets = [5, 0], sizes = [1, 256], strides = [1, 1]} : vector<8x256xf32> to vector<1x256xf32>
    %50 = vector.broadcast %48 : vector<16x1xf32> to vector<16x256xf32>
    %51 = vector.broadcast %49 : vector<1x256xf32> to vector<16x256xf32>
    %52 = arith.mulf %50, %51 : vector<16x256xf32>
    %53 = arith.addf %47, %52 : vector<16x256xf32>
    %54 = vector.extract_strided_slice %5 {offsets = [0, 6], sizes = [16, 1], strides = [1, 1]} : vector<16x8xf32> to vector<16x1xf32>
    %55 = vector.extract_strided_slice %18 {offsets = [6, 0], sizes = [1, 256], strides = [1, 1]} : vector<8x256xf32> to vector<1x256xf32>
    %56 = vector.broadcast %54 : vector<16x1xf32> to vector<16x256xf32>
    %57 = vector.broadcast %55 : vector<1x256xf32> to vector<16x256xf32>
    %58 = arith.mulf %56, %57 : vector<16x256xf32>
    %59 = arith.addf %53, %58 : vector<16x256xf32>
    %60 = vector.extract_strided_slice %5 {offsets = [0, 7], sizes = [16, 1], strides = [1, 1]} : vector<16x8xf32> to vector<16x1xf32>
    %61 = vector.extract_strided_slice %18 {offsets = [7, 0], sizes = [1, 256], strides = [1, 1]} : vector<8x256xf32> to vector<1x256xf32>
    %62 = vector.broadcast %60 : vector<16x1xf32> to vector<16x256xf32>
    %63 = vector.broadcast %61 : vector<1x256xf32> to vector<16x256xf32>
    %64 = arith.mulf %62, %63 : vector<16x256xf32>
    %65 = arith.addf %59, %64 : vector<16x256xf32>
    %66 = vector.broadcast %6 : vector<16x1xf32> to vector<16x256xf32>
    %67 = arith.addf %65, %66 : vector<16x256xf32>
    %c0_14 = arith.constant 0 : index
    %c0_15 = arith.constant 0 : index
    %68 = vector.load %arg9[%c0_14, %c0_15] : memref<16x1xf32, #tpu.memory_space<vmem>>, vector<16x1xf32>
    %cst_16 = arith.constant 1.000000e-03 : f32
    %69 = vector.broadcast %cst_16 : f32 to vector<16x1xf32>
    %70 = arith.addf %68, %69 : vector<16x1xf32>
    %71 = math.rsqrt %70 : vector<16x1xf32>
    %c0_17 = arith.constant 0 : index
    %c0_18 = arith.constant 0 : index
    %72 = vector.load %arg10[%c0_17, %c0_18] : memref<16x1xf32, #tpu.memory_space<vmem>>, vector<16x1xf32>
    %73 = arith.mulf %71, %72 : vector<16x1xf32>
    %c0_19 = arith.constant 0 : index
    %c0_20 = arith.constant 0 : index
    %74 = vector.load %arg11[%c0_19, %c0_20] : memref<16x1xf32, #tpu.memory_space<vmem>>, vector<16x1xf32>
    %c0_21 = arith.constant 0 : index
    %c0_22 = arith.constant 0 : index
    %75 = vector.load %arg8[%c0_21, %c0_22] : memref<16x1xf32, #tpu.memory_space<vmem>>, vector<16x1xf32>
    %76 = arith.mulf %75, %73 : vector<16x1xf32>
    %77 = arith.subf %74, %76 : vector<16x1xf32>
    %78 = vector.broadcast %73 : vector<16x1xf32> to vector<16x256xf32>
    %79 = arith.mulf %67, %78 : vector<16x256xf32>
    %80 = vector.broadcast %77 : vector<16x1xf32> to vector<16x256xf32>
    %81 = arith.addf %79, %80 : vector<16x256xf32>
    %cst_23 = arith.constant 0.000000e+00 : f32
    %82 = vector.broadcast %cst_23 : f32 to vector<16x256xf32>
    %83 = arith.maximumf %81, %82 : vector<16x256xf32>
    %c0_24 = arith.constant 0 : index
    %c0_25 = arith.constant 0 : index
    %84 = vector.load %arg12[%c0_24, %c0_25] : memref<16x24xf32, #tpu.memory_space<vmem>>, vector<16x24xf32>
    %85 = vector.extract_strided_slice %84 {offsets = [0, 0], sizes = [16, 16], strides = [1, 1]} : vector<16x24xf32> to vector<16x16xf32>
    %86 = vector.extract_strided_slice %85 {offsets = [0, 0], sizes = [16, 1], strides = [1, 1]} : vector<16x16xf32> to vector<16x1xf32>
    %87 = vector.extract_strided_slice %83 {offsets = [0, 0], sizes = [1, 256], strides = [1, 1]} : vector<16x256xf32> to vector<1x256xf32>
    %88 = vector.broadcast %86 : vector<16x1xf32> to vector<16x256xf32>
    %89 = vector.broadcast %87 : vector<1x256xf32> to vector<16x256xf32>
    %90 = arith.mulf %88, %89 : vector<16x256xf32>
    %91 = vector.extract_strided_slice %85 {offsets = [0, 1], sizes = [16, 1], strides = [1, 1]} : vector<16x16xf32> to vector<16x1xf32>
    %92 = vector.extract_strided_slice %83 {offsets = [1, 0], sizes = [1, 256], strides = [1, 1]} : vector<16x256xf32> to vector<1x256xf32>
    %93 = vector.broadcast %91 : vector<16x1xf32> to vector<16x256xf32>
    %94 = vector.broadcast %92 : vector<1x256xf32> to vector<16x256xf32>
    %95 = arith.mulf %93, %94 : vector<16x256xf32>
    %96 = arith.addf %90, %95 : vector<16x256xf32>
    %97 = vector.extract_strided_slice %85 {offsets = [0, 2], sizes = [16, 1], strides = [1, 1]} : vector<16x16xf32> to vector<16x1xf32>
    %98 = vector.extract_strided_slice %83 {offsets = [2, 0], sizes = [1, 256], strides = [1, 1]} : vector<16x256xf32> to vector<1x256xf32>
    %99 = vector.broadcast %97 : vector<16x1xf32> to vector<16x256xf32>
    %100 = vector.broadcast %98 : vector<1x256xf32> to vector<16x256xf32>
    %101 = arith.mulf %99, %100 : vector<16x256xf32>
    %102 = arith.addf %96, %101 : vector<16x256xf32>
    %103 = vector.extract_strided_slice %85 {offsets = [0, 3], sizes = [16, 1], strides = [1, 1]} : vector<16x16xf32> to vector<16x1xf32>
    %104 = vector.extract_strided_slice %83 {offsets = [3, 0], sizes = [1, 256], strides = [1, 1]} : vector<16x256xf32> to vector<1x256xf32>
    %105 = vector.broadcast %103 : vector<16x1xf32> to vector<16x256xf32>
    %106 = vector.broadcast %104 : vector<1x256xf32> to vector<16x256xf32>
    %107 = arith.mulf %105, %106 : vector<16x256xf32>
    %108 = arith.addf %102, %107 : vector<16x256xf32>
    %109 = vector.extract_strided_slice %85 {offsets = [0, 4], sizes = [16, 1], strides = [1, 1]} : vector<16x16xf32> to vector<16x1xf32>
    %110 = vector.extract_strided_slice %83 {offsets = [4, 0], sizes = [1, 256], strides = [1, 1]} : vector<16x256xf32> to vector<1x256xf32>
    %111 = vector.broadcast %109 : vector<16x1xf32> to vector<16x256xf32>
    %112 = vector.broadcast %110 : vector<1x256xf32> to vector<16x256xf32>
    %113 = arith.mulf %111, %112 : vector<16x256xf32>
    %114 = arith.addf %108, %113 : vector<16x256xf32>
    %115 = vector.extract_strided_slice %85 {offsets = [0, 5], sizes = [16, 1], strides = [1, 1]} : vector<16x16xf32> to vector<16x1xf32>
    %116 = vector.extract_strided_slice %83 {offsets = [5, 0], sizes = [1, 256], strides = [1, 1]} : vector<16x256xf32> to vector<1x256xf32>
    %117 = vector.broadcast %115 : vector<16x1xf32> to vector<16x256xf32>
    %118 = vector.broadcast %116 : vector<1x256xf32> to vector<16x256xf32>
    %119 = arith.mulf %117, %118 : vector<16x256xf32>
    %120 = arith.addf %114, %119 : vector<16x256xf32>
    %121 = vector.extract_strided_slice %85 {offsets = [0, 6], sizes = [16, 1], strides = [1, 1]} : vector<16x16xf32> to vector<16x1xf32>
    %122 = vector.extract_strided_slice %83 {offsets = [6, 0], sizes = [1, 256], strides = [1, 1]} : vector<16x256xf32> to vector<1x256xf32>
    %123 = vector.broadcast %121 : vector<16x1xf32> to vector<16x256xf32>
    %124 = vector.broadcast %122 : vector<1x256xf32> to vector<16x256xf32>
    %125 = arith.mulf %123, %124 : vector<16x256xf32>
    %126 = arith.addf %120, %125 : vector<16x256xf32>
    %127 = vector.extract_strided_slice %85 {offsets = [0, 7], sizes = [16, 1], strides = [1, 1]} : vector<16x16xf32> to vector<16x1xf32>
    %128 = vector.extract_strided_slice %83 {offsets = [7, 0], sizes = [1, 256], strides = [1, 1]} : vector<16x256xf32> to vector<1x256xf32>
    %129 = vector.broadcast %127 : vector<16x1xf32> to vector<16x256xf32>
    %130 = vector.broadcast %128 : vector<1x256xf32> to vector<16x256xf32>
    %131 = arith.mulf %129, %130 : vector<16x256xf32>
    %132 = arith.addf %126, %131 : vector<16x256xf32>
    %133 = vector.extract_strided_slice %85 {offsets = [0, 8], sizes = [16, 1], strides = [1, 1]} : vector<16x16xf32> to vector<16x1xf32>
    %134 = vector.extract_strided_slice %83 {offsets = [8, 0], sizes = [1, 256], strides = [1, 1]} : vector<16x256xf32> to vector<1x256xf32>
    %135 = vector.broadcast %133 : vector<16x1xf32> to vector<16x256xf32>
    %136 = vector.broadcast %134 : vector<1x256xf32> to vector<16x256xf32>
    %137 = arith.mulf %135, %136 : vector<16x256xf32>
    %138 = arith.addf %132, %137 : vector<16x256xf32>
    %139 = vector.extract_strided_slice %85 {offsets = [0, 9], sizes = [16, 1], strides = [1, 1]} : vector<16x16xf32> to vector<16x1xf32>
    %140 = vector.extract_strided_slice %83 {offsets = [9, 0], sizes = [1, 256], strides = [1, 1]} : vector<16x256xf32> to vector<1x256xf32>
    %141 = vector.broadcast %139 : vector<16x1xf32> to vector<16x256xf32>
    %142 = vector.broadcast %140 : vector<1x256xf32> to vector<16x256xf32>
    %143 = arith.mulf %141, %142 : vector<16x256xf32>
    %144 = arith.addf %138, %143 : vector<16x256xf32>
    %145 = vector.extract_strided_slice %85 {offsets = [0, 10], sizes = [16, 1], strides = [1, 1]} : vector<16x16xf32> to vector<16x1xf32>
    %146 = vector.extract_strided_slice %83 {offsets = [10, 0], sizes = [1, 256], strides = [1, 1]} : vector<16x256xf32> to vector<1x256xf32>
    %147 = vector.broadcast %145 : vector<16x1xf32> to vector<16x256xf32>
    %148 = vector.broadcast %146 : vector<1x256xf32> to vector<16x256xf32>
    %149 = arith.mulf %147, %148 : vector<16x256xf32>
    %150 = arith.addf %144, %149 : vector<16x256xf32>
    %151 = vector.extract_strided_slice %85 {offsets = [0, 11], sizes = [16, 1], strides = [1, 1]} : vector<16x16xf32> to vector<16x1xf32>
    %152 = vector.extract_strided_slice %83 {offsets = [11, 0], sizes = [1, 256], strides = [1, 1]} : vector<16x256xf32> to vector<1x256xf32>
    %153 = vector.broadcast %151 : vector<16x1xf32> to vector<16x256xf32>
    %154 = vector.broadcast %152 : vector<1x256xf32> to vector<16x256xf32>
    %155 = arith.mulf %153, %154 : vector<16x256xf32>
    %156 = arith.addf %150, %155 : vector<16x256xf32>
    %157 = vector.extract_strided_slice %85 {offsets = [0, 12], sizes = [16, 1], strides = [1, 1]} : vector<16x16xf32> to vector<16x1xf32>
    %158 = vector.extract_strided_slice %83 {offsets = [12, 0], sizes = [1, 256], strides = [1, 1]} : vector<16x256xf32> to vector<1x256xf32>
    %159 = vector.broadcast %157 : vector<16x1xf32> to vector<16x256xf32>
    %160 = vector.broadcast %158 : vector<1x256xf32> to vector<16x256xf32>
    %161 = arith.mulf %159, %160 : vector<16x256xf32>
    %162 = arith.addf %156, %161 : vector<16x256xf32>
    %163 = vector.extract_strided_slice %85 {offsets = [0, 13], sizes = [16, 1], strides = [1, 1]} : vector<16x16xf32> to vector<16x1xf32>
    %164 = vector.extract_strided_slice %83 {offsets = [13, 0], sizes = [1, 256], strides = [1, 1]} : vector<16x256xf32> to vector<1x256xf32>
    %165 = vector.broadcast %163 : vector<16x1xf32> to vector<16x256xf32>
    %166 = vector.broadcast %164 : vector<1x256xf32> to vector<16x256xf32>
    %167 = arith.mulf %165, %166 : vector<16x256xf32>
    %168 = arith.addf %162, %167 : vector<16x256xf32>
    %169 = vector.extract_strided_slice %85 {offsets = [0, 14], sizes = [16, 1], strides = [1, 1]} : vector<16x16xf32> to vector<16x1xf32>
    %170 = vector.extract_strided_slice %83 {offsets = [14, 0], sizes = [1, 256], strides = [1, 1]} : vector<16x256xf32> to vector<1x256xf32>
    %171 = vector.broadcast %169 : vector<16x1xf32> to vector<16x256xf32>
    %172 = vector.broadcast %170 : vector<1x256xf32> to vector<16x256xf32>
    %173 = arith.mulf %171, %172 : vector<16x256xf32>
    %174 = arith.addf %168, %173 : vector<16x256xf32>
    %175 = vector.extract_strided_slice %85 {offsets = [0, 15], sizes = [16, 1], strides = [1, 1]} : vector<16x16xf32> to vector<16x1xf32>
    %176 = vector.extract_strided_slice %83 {offsets = [15, 0], sizes = [1, 256], strides = [1, 1]} : vector<16x256xf32> to vector<1x256xf32>
    %177 = vector.broadcast %175 : vector<16x1xf32> to vector<16x256xf32>
    %178 = vector.broadcast %176 : vector<1x256xf32> to vector<16x256xf32>
    %179 = arith.mulf %177, %178 : vector<16x256xf32>
    %180 = arith.addf %174, %179 : vector<16x256xf32>
    %181 = vector.extract_strided_slice %84 {offsets = [0, 16], sizes = [16, 8], strides = [1, 1]} : vector<16x24xf32> to vector<16x8xf32>
    %182 = vector.extract_strided_slice %181 {offsets = [0, 0], sizes = [16, 1], strides = [1, 1]} : vector<16x8xf32> to vector<16x1xf32>
    %183 = vector.extract_strided_slice %0 {offsets = [0, 0], sizes = [1, 256], strides = [1, 1]} : vector<8x256xf32> to vector<1x256xf32>
    %184 = vector.broadcast %182 : vector<16x1xf32> to vector<16x256xf32>
    %185 = vector.broadcast %183 : vector<1x256xf32> to vector<16x256xf32>
    %186 = arith.mulf %184, %185 : vector<16x256xf32>
    %187 = vector.extract_strided_slice %181 {offsets = [0, 1], sizes = [16, 1], strides = [1, 1]} : vector<16x8xf32> to vector<16x1xf32>
    %188 = vector.extract_strided_slice %0 {offsets = [1, 0], sizes = [1, 256], strides = [1, 1]} : vector<8x256xf32> to vector<1x256xf32>
    %189 = vector.broadcast %187 : vector<16x1xf32> to vector<16x256xf32>
    %190 = vector.broadcast %188 : vector<1x256xf32> to vector<16x256xf32>
    %191 = arith.mulf %189, %190 : vector<16x256xf32>
    %192 = arith.addf %186, %191 : vector<16x256xf32>
    %193 = vector.extract_strided_slice %181 {offsets = [0, 2], sizes = [16, 1], strides = [1, 1]} : vector<16x8xf32> to vector<16x1xf32>
    %194 = vector.extract_strided_slice %0 {offsets = [2, 0], sizes = [1, 256], strides = [1, 1]} : vector<8x256xf32> to vector<1x256xf32>
    %195 = vector.broadcast %193 : vector<16x1xf32> to vector<16x256xf32>
    %196 = vector.broadcast %194 : vector<1x256xf32> to vector<16x256xf32>
    %197 = arith.mulf %195, %196 : vector<16x256xf32>
    %198 = arith.addf %192, %197 : vector<16x256xf32>
    %199 = vector.extract_strided_slice %181 {offsets = [0, 3], sizes = [16, 1], strides = [1, 1]} : vector<16x8xf32> to vector<16x1xf32>
    %200 = vector.extract_strided_slice %0 {offsets = [3, 0], sizes = [1, 256], strides = [1, 1]} : vector<8x256xf32> to vector<1x256xf32>
    %201 = vector.broadcast %199 : vector<16x1xf32> to vector<16x256xf32>
    %202 = vector.broadcast %200 : vector<1x256xf32> to vector<16x256xf32>
    %203 = arith.mulf %201, %202 : vector<16x256xf32>
    %204 = arith.addf %198, %203 : vector<16x256xf32>
    %205 = vector.extract_strided_slice %181 {offsets = [0, 4], sizes = [16, 1], strides = [1, 1]} : vector<16x8xf32> to vector<16x1xf32>
    %206 = vector.extract_strided_slice %0 {offsets = [4, 0], sizes = [1, 256], strides = [1, 1]} : vector<8x256xf32> to vector<1x256xf32>
    %207 = vector.broadcast %205 : vector<16x1xf32> to vector<16x256xf32>
    %208 = vector.broadcast %206 : vector<1x256xf32> to vector<16x256xf32>
    %209 = arith.mulf %207, %208 : vector<16x256xf32>
    %210 = arith.addf %204, %209 : vector<16x256xf32>
    %211 = vector.extract_strided_slice %181 {offsets = [0, 5], sizes = [16, 1], strides = [1, 1]} : vector<16x8xf32> to vector<16x1xf32>
    %212 = vector.extract_strided_slice %0 {offsets = [5, 0], sizes = [1, 256], strides = [1, 1]} : vector<8x256xf32> to vector<1x256xf32>
    %213 = vector.broadcast %211 : vector<16x1xf32> to vector<16x256xf32>
    %214 = vector.broadcast %212 : vector<1x256xf32> to vector<16x256xf32>
    %215 = arith.mulf %213, %214 : vector<16x256xf32>
    %216 = arith.addf %210, %215 : vector<16x256xf32>
    %217 = vector.extract_strided_slice %181 {offsets = [0, 6], sizes = [16, 1], strides = [1, 1]} : vector<16x8xf32> to vector<16x1xf32>
    %218 = vector.extract_strided_slice %0 {offsets = [6, 0], sizes = [1, 256], strides = [1, 1]} : vector<8x256xf32> to vector<1x256xf32>
    %219 = vector.broadcast %217 : vector<16x1xf32> to vector<16x256xf32>
    %220 = vector.broadcast %218 : vector<1x256xf32> to vector<16x256xf32>
    %221 = arith.mulf %219, %220 : vector<16x256xf32>
    %222 = arith.addf %216, %221 : vector<16x256xf32>
    %223 = vector.extract_strided_slice %181 {offsets = [0, 7], sizes = [16, 1], strides = [1, 1]} : vector<16x8xf32> to vector<16x1xf32>
    %224 = vector.extract_strided_slice %0 {offsets = [7, 0], sizes = [1, 256], strides = [1, 1]} : vector<8x256xf32> to vector<1x256xf32>
    %225 = vector.broadcast %223 : vector<16x1xf32> to vector<16x256xf32>
    %226 = vector.broadcast %224 : vector<1x256xf32> to vector<16x256xf32>
    %227 = arith.mulf %225, %226 : vector<16x256xf32>
    %228 = arith.addf %222, %227 : vector<16x256xf32>
    %229 = arith.addf %180, %228 : vector<16x256xf32>
    %c0_26 = arith.constant 0 : index
    %c0_27 = arith.constant 0 : index
    %230 = vector.load %arg13[%c0_26, %c0_27] : memref<16x1xf32, #tpu.memory_space<vmem>>, vector<16x1xf32>
    %231 = vector.broadcast %230 : vector<16x1xf32> to vector<16x256xf32>
    %232 = arith.addf %229, %231 : vector<16x256xf32>
    %c0_28 = arith.constant 0 : index
    %c0_29 = arith.constant 0 : index
    %233 = vector.load %arg14[%c0_28, %c0_29] : memref<16x256xf32, #tpu.memory_space<vmem>>, vector<16x256xf32>
    tpu.vector_store %arg14[%c0_28, %c0_29], %232 {strides = array<i32>} : memref<16x256xf32, #tpu.memory_space<vmem>>, vector<16x256xf32>,
    return
  }
  func.func @transform_0(%arg0: i32) -> (i32, i32) {
    %c0_i32 = arith.constant 0 : i32
    %c0_i32_0 = arith.constant 0 : i32
    return %arg0, %c0_i32 : i32, i32
  }
  func.func @transform_1(%arg0: i32) -> (i32, i32) {
    %c0_i32 = arith.constant 0 : i32
    %c0_i32_0 = arith.constant 0 : i32
    return %arg0, %c0_i32 : i32, i32
  }
  func.func @transform_2(%arg0: i32) -> (i32, i32) {
    %c0_i32 = arith.constant 0 : i32
    %c0_i32_0 = arith.constant 0 : i32
    return %arg0, %c0_i32 : i32, i32
  }
  func.func @transform_3(%arg0: i32) -> (i32, i32) {
    %c0_i32 = arith.constant 0 : i32
    %c0_i32_0 = arith.constant 0 : i32
    %c0_i32_1 = arith.constant 0 : i32
    return %c0_i32, %c0_i32_0 : i32, i32
  }
  func.func @transform_4(%arg0: i32) -> (i32, i32) {
    %c0_i32 = arith.constant 0 : i32
    %c0_i32_0 = arith.constant 0 : i32
    %c0_i32_1 = arith.constant 0 : i32
    return %c0_i32, %c0_i32_0 : i32, i32
  }
  func.func @transform_5(%arg0: i32) -> (i32, i32) {
    %c0_i32 = arith.constant 0 : i32
    %c0_i32_0 = arith.constant 0 : i32
    %c0_i32_1 = arith.constant 0 : i32
    return %c0_i32, %c0_i32_0 : i32, i32
  }
  func.func @transform_6(%arg0: i32) -> (i32, i32) {
    %c0_i32 = arith.constant 0 : i32
    %c0_i32_0 = arith.constant 0 : i32
    %c0_i32_1 = arith.constant 0 : i32
    return %c0_i32, %c0_i32_0 : i32, i32
  }
  func.func @transform_7(%arg0: i32) -> (i32, i32) {
    %c0_i32 = arith.constant 0 : i32
    %c0_i32_0 = arith.constant 0 : i32
    return %arg0, %c0_i32 : i32, i32
  }
  func.func @transform_8(%arg0: i32) -> (i32, i32) {
    %c0_i32 = arith.constant 0 : i32
    %c0_i32_0 = arith.constant 0 : i32
    return %arg0, %c0_i32 : i32, i32
  }
  func.func @transform_9(%arg0: i32) -> (i32, i32) {
    %c0_i32 = arith.constant 0 : i32
    %c0_i32_0 = arith.constant 0 : i32
    %c0_i32_1 = arith.constant 0 : i32
    return %c0_i32, %c0_i32_0 : i32, i32
  }
  func.func @transform_10(%arg0: i32) -> (i32, i32) {
    %c0_i32 = arith.constant 0 : i32
    %c0_i32_0 = arith.constant 0 : i32
    %c0_i32_1 = arith.constant 0 : i32
    return %c0_i32, %c0_i32_0 : i32, i32
  }
  func.func @transform_11(%arg0: i32) -> (i32, i32) {
    %c0_i32 = arith.constant 0 : i32
    %c0_i32_0 = arith.constant 0 : i32
    %c0_i32_1 = arith.constant 0 : i32
    return %c0_i32, %c0_i32_0 : i32, i32
  }
  func.func @transform_12(%arg0: i32) -> (i32, i32) {
    %c0_i32 = arith.constant 0 : i32
    %c0_i32_0 = arith.constant 0 : i32
    %c0_i32_1 = arith.constant 0 : i32
    return %c0_i32, %c0_i32_0 : i32, i32
  }
  func.func @transform_13(%arg0: i32) -> (i32, i32) {
    %c0_i32 = arith.constant 0 : i32
    %c0_i32_0 = arith.constant 0 : i32
    return %arg0, %c0_i32 : i32, i32
  }
}

</mosaic_0001>

<llo_original>
// kernel: pointcn_forward.3
$region0: #{pointcn_forward.3}
  #allocation0 [shape = 'u32[]', space=smem, size = 0x4, offset = 0x4, fixed_abs, tag = 'smem constant byte address 0x4 - core index']
  #allocation1 [shape = 'u32[144,128]{1,0:T(1,128)}', space=vmem, size = 0x12000, scoped, tag = 'internal scratch']
  %s0 = inlined_call_operand.vmem [shape: f32[8,256], index: 0, kind: input, shape index: {}]
  %s1 = inlined_call_operand.vmem [shape: f32[8,1], index: 1, kind: output, shape index: {0}]
  %s2 = inlined_call_operand.vmem [shape: f32[8,1], index: 2, kind: output, shape index: {1}]
  %3 = xla_tuple %s1, %s2
  %s4 = sld [smem:[#allocation0]]
  $region22: #{pointcn_forward.3} parent=0
    _
  %s6 = ssub.s32 1, %s4
  %s7 = scalar_select 0, %s6, %s4
  // Predicated region
  $region2: #{pointcn_forward.3} parent=0 // pred_check
    _
  $region3: #{pointcn_forward.3} parent=0 // pred_check_branch
    %9 = sbr.rel (0) target = $region5
  $region4: #{pointcn_forward.3} parent=0 // pred_region
    _
  $region5: #{pointcn_forward.3} parent=0 // pred_fallthru
    _
  %v10 = vld [vmem:[%s0] sm:$0xff]
  %v11 = vld [vmem:[%s0 + $0x8] sm:$0xff]
  %v12 = vadd.f32 %v10, %v11
  %13 = vadd.xlane.f32.xlu0 %v12
  %v14 = vpop.xlane.xlu0 %13
  %v15 = vrcp.pop 256.0
  %v16 = vmul.f32 %v14, %v15
  %v17 = vsub.f32 %v10, %v16
  %v18 = vsub.f32 %v11, %v16
  %v19 = vmul.f32 %v17, %v17
  %v20 = vmul.f32 %v18, %v18
  %v21 = vadd.f32 %v19, %v20
  %22 = vadd.xlane.f32.xlu0 %v21
  %v23 = vpop.xlane.xlu0 %22
  %v24 = vmul.f32 %v23, %v15
  %vm25 = vcmask 7168
  %26 = vst.msk [vmem:[%s1] sm:$0xff] %vm25, %v16
  %27 = vst.msk [vmem:[%s2] sm:$0xff] %vm25, %v24
  // Predicated region
  $region6: #{pointcn_forward.3} parent=0 // pred_check
    _
  $region7: #{pointcn_forward.3} parent=0 // pred_check_branch
    %29 = sbr.rel (0) target = $region9
  $region8: #{pointcn_forward.3} parent=0 // pred_region
    _
  $region9: #{pointcn_forward.3} parent=0 // pred_fallthru
    _
  // Predicated region
  $region10: #{pointcn_forward.3} parent=0 // pred_check
    _
  $region11: #{pointcn_forward.3} parent=0 // pred_check_branch
    %31 = sbr.rel (0) target = $region13
  $region12: #{pointcn_forward.3} parent=0 // pred_region
    _
  $region13: #{pointcn_forward.3} parent=0 // pred_fallthru
    _
  // Predicated region
  $region14: #{pointcn_forward.3} parent=0 // pred_check
    _
  $region15: #{pointcn_forward.3} parent=0 // pred_check_branch
    %33 = sbr.rel (0) target = $region17
  $region16: #{pointcn_forward.3} parent=0 // pred_region
    _
  $region17: #{pointcn_forward.3} parent=0 // pred_fallthru
    _
  // Predicated region
  $region18: #{pointcn_forward.3} parent=0 // pred_check
    _
  $region19: #{pointcn_forward.3} parent=0 // pred_check_branch
    %35 = sbr.rel (0) target = $region21
  $region20: #{pointcn_forward.3} parent=0 // pred_region
    _
  $region21: #{pointcn_forward.3} parent=0 // pred_fallthru
    _

// kernel: pointcn_forward.4
$region0: #{pointcn_forward.4}
  #allocation0 [shape = 'u32[]', space=smem, size = 0x4, offset = 0x4, fixed_abs, tag = 'smem constant byte address 0x4 - core index']
  #allocation1 [shape = 'u32[144,128]{1,0:T(1,128)}', space=vmem, size = 0x12000, scoped, tag = 'internal scratch']
  %s0 = inlined_call_operand.vmem [shape: f32[8,256], index: 0, kind: input, shape index: {}]
  %s1 = inlined_call_operand.vmem [shape: f32[8,1], index: 1, kind: input, shape index: {}]
  %s2 = inlined_call_operand.vmem [shape: f32[8,1], index: 2, kind: input, shape index: {}]
  %s3 = inlined_call_operand.vmem [shape: f32[8,1], index: 3, kind: input, shape index: {}]
  %s4 = inlined_call_operand.vmem [shape: f32[8,1], index: 4, kind: input, shape index: {}]
  %s5 = inlined_call_operand.vmem [shape: f32[16,8], index: 5, kind: input, shape index: {}]
  %s6 = inlined_call_operand.vmem [shape: f32[16,1], index: 6, kind: input, shape index: {}]
  %s7 = inlined_call_operand.vmem [shape: f32[16,1], index: 7, kind: output, shape index: {0}]
  %s8 = inlined_call_operand.vmem [shape: f32[16,1], index: 8, kind: output, shape index: {1}]
  %9 = xla_tuple %s7, %s8
  %s10 = sld [smem:[#allocation0]]
  $region46: #{pointcn_forward.4} parent=0
    _
  %s12 = ssub.s32 1, %s10
  %s13 = scalar_select 0, %s12, %s10
  // Predicated region
  $region2: #{pointcn_forward.4} parent=0 // pred_check
    _
  $region3: #{pointcn_forward.4} parent=0 // pred_check_branch
    %15 = sbr.rel (0) target = $region5
  $region4: #{pointcn_forward.4} parent=0 // pred_region
    _
  $region5: #{pointcn_forward.4} parent=0 // pred_fallthru
    _
  // Predicated region
  $region6: #{pointcn_forward.4} parent=0 // pred_check
    _
  $region7: #{pointcn_forward.4} parent=0 // pred_check_branch
    %17 = sbr.rel (0) target = $region9
  $region8: #{pointcn_forward.4} parent=0 // pred_region
    _
  $region9: #{pointcn_forward.4} parent=0 // pred_fallthru
    _
  // Predicated region
  $region10: #{pointcn_forward.4} parent=0 // pred_check
    _
  $region11: #{pointcn_forward.4} parent=0 // pred_check_branch
    %19 = sbr.rel (0) target = $region13
  $region12: #{pointcn_forward.4} parent=0 // pred_region
    _
  $region13: #{pointcn_forward.4} parent=0 // pred_fallthru
    _
  // Predicated region
  $region14: #{pointcn_forward.4} parent=0 // pred_check
    _
  $region15: #{pointcn_forward.4} parent=0 // pred_check_branch
    %21 = sbr.rel (0) target = $region17
  $region16: #{pointcn_forward.4} parent=0 // pred_region
    _
  $region17: #{pointcn_forward.4} parent=0 // pred_fallthru
    _
  // Predicated region
  $region18: #{pointcn_forward.4} parent=0 // pred_check
    _
  $region19: #{pointcn_forward.4} parent=0 // pred_check_branch
    %23 = sbr.rel (0) target = $region21
  $region20: #{pointcn_forward.4} parent=0 // pred_region
    _
  $region21: #{pointcn_forward.4} parent=0 // pred_fallthru
    _
  // Predicated region
  $region22: #{pointcn_forward.4} parent=0 // pred_check
    _
  $region23: #{pointcn_forward.4} parent=0 // pred_check_branch
    %25 = sbr.rel (0) target = $region25
  $region24: #{pointcn_forward.4} parent=0 // pred_region
    _
  $region25: #{pointcn_forward.4} parent=0 // pred_fallthru
    _
  // Predicated region
  $region26: #{pointcn_forward.4} parent=0 // pred_check
    _
  $region27: #{pointcn_forward.4} parent=0 // pred_check_branch
    %27 = sbr.rel (0) target = $region29
  $region28: #{pointcn_forward.4} parent=0 // pred_region
    _
  $region29: #{pointcn_forward.4} parent=0 // pred_fallthru
    _
  %v28 = vld [vmem:[%s0] sm:$0xff]
  %v29 = vld [vmem:[%s0 + $0x8] sm:$0xff]
  %v30 = vld [vmem:[%s1] sm:$0xff]
  %v31 = vld [vmem:[%s2] sm:$0xff]
  %v32 = vld [vmem:[%s3] sm:$0xff]
  %v33 = vld [vmem:[%s4] sm:$0xff]
  %v34 = vld [vmem:[%s5] sm:$0xff]
  %v35 = vld [vmem:[%s5 + $0x8] sm:$0xff]
  %v36 = vld [vmem:[%s6] sm:$0xff]
  %v37 = vld [vmem:[%s6 + $0x8] sm:$0xff]
  %v38 = vadd.f32 %v31, 0.001
  %v39 = vrsqrt.pop %v38
  %v40 = vmul.f32 %v39, %v32
  %v41 = vmul.f32 %v30, %v40
  %v42 = vsub.f32 %v33, %v41
  %44 = vset.pattern.permute.xlu0 0
  %45 = vperm.xlu0 %44, %v40
  %v46 = vpop.permute.xlu0 %45
  %v48 = vmul.f32 %v28, %v46
  %v49 = vmul.f32 %v29, %v46
  %51 = vset.pattern.permute.xlu0 0
  %52 = vperm.xlu0 %51, %v42
  %v53 = vpop.permute.xlu0 %52
  %v55 = vadd.f32 %v48, %v53
  %v56 = vadd.f32 %v49, %v53
  %v57 = vmax.f32 %v55, 0.0
  %v58 = vmax.f32 %v56, 0.0
  %60 = vset.pattern.permute.xlu0 0
  %61 = vperm.xlu0 %60, %v34
  %v62 = vpop.permute.xlu0 %61
  %65 = vset.pattern.permute.xlu0 0
  %66 = vperm.xlu0 %65, %v35
  %v67 = vpop.permute.xlu0 %66
  %v69 = vlaneseq
  %v70 = vshrl.u32 %v69, 7
  %v71 = vsub.s32 0, %v70
  %v72 = vrot.slane %v57, %v71
  %v73 = vlaneseq
  %v74 = vshrl.u32 %v73, 7
  %v75 = vsub.s32 0, %v74
  %v76 = vrot.slane %v58, %v75
  %v77 = vmul.f32 %v62, %v72
  %v78 = vmul.f32 %v62, %v76
  %v79 = vmul.f32 %v67, %v72
  %v80 = vmul.f32 %v67, %v76
  %81 = vset.pattern.permute.xlu0 1
  %82 = vperm.xlu0 %81, %v34
  %v83 = vpop.permute.xlu0 %82
  %85 = vset.pattern.permute.xlu0 1
  %86 = vperm.xlu0 %85, %v35
  %v87 = vpop.permute.xlu0 %86
  %v89 = vlaneseq
  %v90 = vshrl.u32 %v89, 7
  %v91 = vsub.s32 1, %v90
  %v92 = vrot.slane %v57, %v91
  %v93 = vlaneseq
  %v94 = vshrl.u32 %v93, 7
  %v95 = vsub.s32 1, %v94
  %v96 = vrot.slane %v58, %v95
  %v97 = vmul.f32 %v83, %v92
  %v98 = vmul.f32 %v83, %v96
  %v99 = vmul.f32 %v87, %v92
  %v100 = vmul.f32 %v87, %v96
  %v101 = vadd.f32 %v77, %v97
  %v102 = vadd.f32 %v78, %v98
  %v103 = vadd.f32 %v79, %v99
  %v104 = vadd.f32 %v80, %v100
  %105 = vset.pattern.permute.xlu0 2
  %106 = vperm.xlu0 %105, %v34
  %v107 = vpop.permute.xlu0 %106
  %109 = vset.pattern.permute.xlu0 2
  %110 = vperm.xlu0 %109, %v35
  %v111 = vpop.permute.xlu0 %110
  %v113 = vlaneseq
  %v114 = vshrl.u32 %v113, 7
  %v115 = vsub.s32 2, %v114
  %v116 = vrot.slane %v57, %v115
  %v117 = vlaneseq
  %v118 = vshrl.u32 %v117, 7
  %v119 = vsub.s32 2, %v118
  %v120 = vrot.slane %v58, %v119
  %v121 = vmul.f32 %v107, %v116
  %v122 = vmul.f32 %v107, %v120
  %v123 = vmul.f32 %v111, %v116
  %v124 = vmul.f32 %v111, %v120
  %v125 = vadd.f32 %v101, %v121
  %v126 = vadd.f32 %v102, %v122
  %v127 = vadd.f32 %v103, %v123
  %v128 = vadd.f32 %v104, %v124
  %129 = vset.pattern.permute.xlu0 3
  %130 = vperm.xlu0 %129, %v34
  %v131 = vpop.permute.xlu0 %130
  %133 = vset.pattern.permute.xlu0 3
  %134 = vperm.xlu0 %133, %v35
  %v135 = vpop.permute.xlu0 %134
  %v137 = vlaneseq
  %v138 = vshrl.u32 %v137, 7
  %v139 = vsub.s32 3, %v138
  %v140 = vrot.slane %v57, %v139
  %v141 = vlaneseq
  %v142 = vshrl.u32 %v141, 7
  %v143 = vsub.s32 3, %v142
  %v144 = vrot.slane %v58, %v143
  %v145 = vmul.f32 %v131, %v140
  %v146 = vmul.f32 %v131, %v144
  %v147 = vmul.f32 %v135, %v140
  %v148 = vmul.f32 %v135, %v144
  %v149 = vadd.f32 %v125, %v145
  %v150 = vadd.f32 %v126, %v146
  %v151 = vadd.f32 %v127, %v147
  %v152 = vadd.f32 %v128, %v148
  %153 = vset.pattern.permute.xlu0 4
  %154 = vperm.xlu0 %153, %v34
  %v155 = vpop.permute.xlu0 %154
  %157 = vset.pattern.permute.xlu0 4
  %158 = vperm.xlu0 %157, %v35
  %v159 = vpop.permute.xlu0 %158
  %v161 = vlaneseq
  %v162 = vshrl.u32 %v161, 7
  %v163 = vsub.s32 4, %v162
  %v164 = vrot.slane %v57, %v163
  %v165 = vlaneseq
  %v166 = vshrl.u32 %v165, 7
  %v167 = vsub.s32 4, %v166
  %v168 = vrot.slane %v58, %v167
  %v169 = vmul.f32 %v155, %v164
  %v170 = vmul.f32 %v155, %v168
  %v171 = vmul.f32 %v159, %v164
  %v172 = vmul.f32 %v159, %v168
  %v173 = vadd.f32 %v149, %v169
  %v174 = vadd.f32 %v150, %v170
  %v175 = vadd.f32 %v151, %v171
  %v176 = vadd.f32 %v152, %v172
  %177 = vset.pattern.permute.xlu0 5
  %178 = vperm.xlu0 %177, %v34
  %v179 = vpop.permute.xlu0 %178
  %181 = vset.pattern.permute.xlu0 5
  %182 = vperm.xlu0 %181, %v35
  %v183 = vpop.permute.xlu0 %182
  %v185 = vlaneseq
  %v186 = vshrl.u32 %v185, 7
  %v187 = vsub.s32 5, %v186
  %v188 = vrot.slane %v57, %v187
  %v189 = vlaneseq
  %v190 = vshrl.u32 %v189, 7
  %v191 = vsub.s32 5, %v190
  %v192 = vrot.slane %v58, %v191
  %v193 = vmul.f32 %v179, %v188
  %v194 = vmul.f32 %v179, %v192
  %v195 = vmul.f32 %v183, %v188
  %v196 = vmul.f32 %v183, %v192
  %v197 = vadd.f32 %v173, %v193
  %v198 = vadd.f32 %v174, %v194
  %v199 = vadd.f32 %v175, %v195
  %v200 = vadd.f32 %v176, %v196
  %201 = vset.pattern.permute.xlu0 6
  %202 = vperm.xlu0 %201, %v34
  %v203 = vpop.permute.xlu0 %202
  %205 = vset.pattern.permute.xlu0 6
  %206 = vperm.xlu0 %205, %v35
  %v207 = vpop.permute.xlu0 %206
  %v209 = vlaneseq
  %v210 = vshrl.u32 %v209, 7
  %v211 = vsub.s32 6, %v210
  %v212 = vrot.slane %v57, %v211
  %v213 = vlaneseq
  %v214 = vshrl.u32 %v213, 7
  %v215 = vsub.s32 6, %v214
  %v216 = vrot.slane %v58, %v215
  %v217 = vmul.f32 %v203, %v212
  %v218 = vmul.f32 %v203, %v216
  %v219 = vmul.f32 %v207, %v212
  %v220 = vmul.f32 %v207, %v216
  %v221 = vadd.f32 %v197, %v217
  %v222 = vadd.f32 %v198, %v218
  %v223 = vadd.f32 %v199, %v219
  %v224 = vadd.f32 %v200, %v220
  %225 = vset.pattern.permute.xlu0 7
  %226 = vperm.xlu0 %225, %v34
  %v227 = vpop.permute.xlu0 %226
  %229 = vset.pattern.permute.xlu0 7
  %230 = vperm.xlu0 %229, %v35
  %v231 = vpop.permute.xlu0 %230
  %v233 = vlaneseq
  %v234 = vshrl.u32 %v233, 7
  %v235 = vsub.s32 7, %v234
  %v236 = vrot.slane %v57, %v235
  %v237 = vlaneseq
  %v238 = vshrl.u32 %v237, 7
  %v239 = vsub.s32 7, %v238
  %v240 = vrot.slane %v58, %v239
  %v241 = vmul.f32 %v227, %v236
  %v242 = vmul.f32 %v227, %v240
  %v243 = vmul.f32 %v231, %v236
  %v244 = vmul.f32 %v231, %v240
  %v245 = vadd.f32 %v221, %v241
  %v246 = vadd.f32 %v222, %v242
  %v247 = vadd.f32 %v223, %v243
  %v248 = vadd.f32 %v224, %v244
  %250 = vset.pattern.permute.xlu0 0
  %251 = vperm.xlu0 %250, %v36
  %v252 = vpop.permute.xlu0 %251
  %255 = vset.pattern.permute.xlu0 0
  %256 = vperm.xlu0 %255, %v37
  %v257 = vpop.permute.xlu0 %256
  %v259 = vadd.f32 %v245, %v252
  %v260 = vadd.f32 %v246, %v252
  %v261 = vadd.f32 %v247, %v257
  %v262 = vadd.f32 %v248, %v257
  %v263 = vadd.f32 %v259, %v260
  %264 = vadd.xlane.f32.xlu0 %v263
  %v265 = vpop.xlane.xlu0 %264
  %v266 = vadd.f32 %v261, %v262
  %267 = vadd.xlane.f32.xlu0 %v266
  %v268 = vpop.xlane.xlu0 %267
  %v269 = vrcp.pop 256.0
  %v270 = vmul.f32 %v265, %v269
  %v271 = vmul.f32 %v268, %v269
  %v272 = vsub.f32 %v259, %v270
  %v273 = vsub.f32 %v260, %v270
  %v274 = vsub.f32 %v261, %v271
  %v275 = vsub.f32 %v262, %v271
  %v276 = vmul.f32 %v272, %v272
  %v277 = vmul.f32 %v273, %v273
  %v278 = vmul.f32 %v274, %v274
  %v279 = vmul.f32 %v275, %v275
  %v280 = vadd.f32 %v276, %v277
  %281 = vadd.xlane.f32.xlu0 %v280
  %v282 = vpop.xlane.xlu0 %281
  %v283 = vadd.f32 %v278, %v279
  %284 = vadd.xlane.f32.xlu0 %v283
  %v285 = vpop.xlane.xlu0 %284
  %v286 = vmul.f32 %v282, %v269
  %v287 = vmul.f32 %v285, %v269
  %vm288 = vcmask 7168
  %289 = vst.msk [vmem:[%s7] sm:$0xff] %vm288, %v270
  %290 = vst.msk [vmem:[%s7 + $0x8] sm:$0xff] %vm288, %v271
  %291 = vst.msk [vmem:[%s8] sm:$0xff] %vm288, %v286
  %292 = vst.msk [vmem:[%s8 + $0x8] sm:$0xff] %vm288, %v287
  // Predicated region
  $region30: #{pointcn_forward.4} parent=0 // pred_check
    _
  $region31: #{pointcn_forward.4} parent=0 // pred_check_branch
    %294 = sbr.rel (0) target = $region33
  $region32: #{pointcn_forward.4} parent=0 // pred_region
    _
  $region33: #{pointcn_forward.4} parent=0 // pred_fallthru
    _
  // Predicated region
  $region34: #{pointcn_forward.4} parent=0 // pred_check
    _
  $region35: #{pointcn_forward.4} parent=0 // pred_check_branch
    %296 = sbr.rel (0) target = $region37
  $region36: #{pointcn_forward.4} parent=0 // pred_region
    _
  $region37: #{pointcn_forward.4} parent=0 // pred_fallthru
    _
  // Predicated region
  $region38: #{pointcn_forward.4} parent=0 // pred_check
    _
  $region39: #{pointcn_forward.4} parent=0 // pred_check_branch
    %298 = sbr.rel (0) target = $region41
  $region40: #{pointcn_forward.4} parent=0 // pred_region
    _
  $region41: #{pointcn_forward.4} parent=0 // pred_fallthru
    _
  // Predicated region
  $region42: #{pointcn_forward.4} parent=0 // pred_check
    _
  $region43: #{pointcn_forward.4} parent=0 // pred_check_branch
    %300 = sbr.rel (0) target = $region45
  $region44: #{pointcn_forward.4} parent=0 // pred_region
    _
  $region45: #{pointcn_forward.4} parent=0 // pred_fallthru
    _

// kernel: pointcn_forward.5
$region0: #{pointcn_forward.5}
  #allocation0 [shape = 'u32[]', space=smem, size = 0x4, offset = 0x4, fixed_abs, tag = 'smem constant byte address 0x4 - core index']
  #allocation1 [shape = 'u32[144,128]{1,0:T(1,128)}', space=vmem, size = 0x12000, scoped, tag = 'internal scratch']
  %s0 = inlined_call_operand.vmem [shape: f32[8,256], index: 0, kind: input, shape index: {}]
  %s1 = inlined_call_operand.vmem [shape: f32[8,1], index: 1, kind: input, shape index: {}]
  %s2 = inlined_call_operand.vmem [shape: f32[8,1], index: 2, kind: input, shape index: {}]
  %s3 = inlined_call_operand.vmem [shape: f32[8,1], index: 3, kind: input, shape index: {}]
  %s4 = inlined_call_operand.vmem [shape: f32[8,1], index: 4, kind: input, shape index: {}]
  %s5 = inlined_call_operand.vmem [shape: f32[16,8], index: 5, kind: input, shape index: {}]
  %s6 = inlined_call_operand.vmem [shape: f32[16,1], index: 6, kind: input, shape index: {}]
  %s7 = inlined_call_operand.vmem [shape: f32[16,1], index: 7, kind: input, shape index: {}]
  %s8 = inlined_call_operand.vmem [shape: f32[16,1], index: 8, kind: input, shape index: {}]
  %s9 = inlined_call_operand.vmem [shape: f32[16,1], index: 9, kind: input, shape index: {}]
  %s10 = inlined_call_operand.vmem [shape: f32[16,1], index: 10, kind: input, shape index: {}]
  %s11 = inlined_call_operand.vmem [shape: f32[16,24], index: 11, kind: input, shape index: {}]
  %s12 = inlined_call_operand.vmem [shape: f32[16,1], index: 12, kind: input, shape index: {}]
  %s13 = inlined_call_operand.vmem [shape: f32[16,256], index: 13, kind: output, shape index: {}]
  %s14 = sld [smem:[#allocation0]]
  $region62: #{pointcn_forward.5} parent=0
    _
  %s16 = ssub.s32 1, %s14
  %s17 = scalar_select 0, %s16, %s14
  // Predicated region
  $region2: #{pointcn_forward.5} parent=0 // pred_check
    _
  $region3: #{pointcn_forward.5} parent=0 // pred_check_branch
    %19 = sbr.rel (0) target = $region5
  $region4: #{pointcn_forward.5} parent=0 // pred_region
    _
  $region5: #{pointcn_forward.5} parent=0 // pred_fallthru
    _
  // Predicated region
  $region6: #{pointcn_forward.5} parent=0 // pred_check
    _
  $region7: #{pointcn_forward.5} parent=0 // pred_check_branch
    %21 = sbr.rel (0) target = $region9
  $region8: #{pointcn_forward.5} parent=0 // pred_region
    _
  $region9: #{pointcn_forward.5} parent=0 // pred_fallthru
    _
  // Predicated region
  $region10: #{pointcn_forward.5} parent=0 // pred_check
    _
  $region11: #{pointcn_forward.5} parent=0 // pred_check_branch
    %23 = sbr.rel (0) target = $region13
  $region12: #{pointcn_forward.5} parent=0 // pred_region
    _
  $region13: #{pointcn_forward.5} parent=0 // pred_fallthru
    _
  // Predicated region
  $region14: #{pointcn_forward.5} parent=0 // pred_check
    _
  $region15: #{pointcn_forward.5} parent=0 // pred_check_branch
    %25 = sbr.rel (0) target = $region17
  $region16: #{pointcn_forward.5} parent=0 // pred_region
    _
  $region17: #{pointcn_forward.5} parent=0 // pred_fallthru
    _
  // Predicated region
  $region18: #{pointcn_forward.5} parent=0 // pred_check
    _
  $region19: #{pointcn_forward.5} parent=0 // pred_check_branch
    %27 = sbr.rel (0) target = $region21
  $region20: #{pointcn_forward.5} parent=0 // pred_region
    _
  $region21: #{pointcn_forward.5} parent=0 // pred_fallthru
    _
  // Predicated region
  $region22: #{pointcn_forward.5} parent=0 // pred_check
    _
  $region23: #{pointcn_forward.5} parent=0 // pred_check_branch
    %29 = sbr.rel (0) target = $region25
  $region24: #{pointcn_forward.5} parent=0 // pred_region
    _
  $region25: #{pointcn_forward.5} parent=0 // pred_fallthru
    _
  // Predicated region
  $region26: #{pointcn_forward.5} parent=0 // pred_check
    _
  $region27: #{pointcn_forward.5} parent=0 // pred_check_branch
    %31 = sbr.rel (0) target = $region29
  $region28: #{pointcn_forward.5} parent=0 // pred_region
    _
  $region29: #{pointcn_forward.5} parent=0 // pred_fallthru
    _
  // Predicated region
  $region30: #{pointcn_forward.5} parent=0 // pred_check
    _
  $region31: #{pointcn_forward.5} parent=0 // pred_check_branch
    %33 = sbr.rel (0) target = $region33
  $region32: #{pointcn_forward.5} parent=0 // pred_region
    _
  $region33: #{pointcn_forward.5} parent=0 // pred_fallthru
    _
  // Predicated region
  $region34: #{pointcn_forward.5} parent=0 // pred_check
    _
  $region35: #{pointcn_forward.5} parent=0 // pred_check_branch
    %35 = sbr.rel (0) target = $region37
  $region36: #{pointcn_forward.5} parent=0 // pred_region
    _
  $region37: #{pointcn_forward.5} parent=0 // pred_fallthru
    _
  // Predicated region
  $region38: #{pointcn_forward.5} parent=0 // pred_check
    _
  $region39: #{pointcn_forward.5} parent=0 // pred_check_branch
    %37 = sbr.rel (0) target = $region41
  $region40: #{pointcn_forward.5} parent=0 // pred_region
    _
  $region41: #{pointcn_forward.5} parent=0 // pred_fallthru
    _
  // Predicated region
  $region42: #{pointcn_forward.5} parent=0 // pred_check
    _
  $region43: #{pointcn_forward.5} parent=0 // pred_check_branch
    %39 = sbr.rel (0) target = $region45
  $region44: #{pointcn_forward.5} parent=0 // pred_region
    _
  $region45: #{pointcn_forward.5} parent=0 // pred_fallthru
    _
  // Predicated region
  $region46: #{pointcn_forward.5} parent=0 // pred_check
    _
  $region47: #{pointcn_forward.5} parent=0 // pred_check_branch
    %41 = sbr.rel (0) target = $region49
  $region48: #{pointcn_forward.5} parent=0 // pred_region
    _
  $region49: #{pointcn_forward.5} parent=0 // pred_fallthru
    _
  // Predicated region
  $region50: #{pointcn_forward.5} parent=0 // pred_check
    _
  $region51: #{pointcn_forward.5} parent=0 // pred_check_branch
    %43 = sbr.rel (0) target = $region53
  $region52: #{pointcn_forward.5} parent=0 // pred_region
    _
  $region53: #{pointcn_forward.5} parent=0 // pred_fallthru
    _
  %v44 = vld [vmem:[%s0] sm:$0xff]
  %v45 = vld [vmem:[%s0 + $0x8] sm:$0xff]
  %v46 = vld [vmem:[%s1] sm:$0xff]
  %v47 = vld [vmem:[%s2] sm:$0xff]
  %v48 = vld [vmem:[%s3] sm:$0xff]
  %v49 = vld [vmem:[%s4] sm:$0xff]
  %v50 = vld [vmem:[%s5] sm:$0xff]
  %v51 = vld [vmem:[%s5 + $0x8] sm:$0xff]
  %v52 = vld [vmem:[%s6] sm:$0xff]
  %v53 = vld [vmem:[%s6 + $0x8] sm:$0xff]
  %v54 = vadd.f32 %v47, 0.001
  %v55 = vrsqrt.pop %v54
  %v56 = vmul.f32 %v55, %v48
  %v57 = vmul.f32 %v46, %v56
  %v58 = vsub.f32 %v49, %v57
  %60 = vset.pattern.permute.xlu0 0
  %61 = vperm.xlu0 %60, %v56
  %v62 = vpop.permute.xlu0 %61
  %v64 = vmul.f32 %v44, %v62
  %v65 = vmul.f32 %v45, %v62
  %67 = vset.pattern.permute.xlu0 0
  %68 = vperm.xlu0 %67, %v58
  %v69 = vpop.permute.xlu0 %68
  %v71 = vadd.f32 %v64, %v69
  %v72 = vadd.f32 %v65, %v69
  %v73 = vmax.f32 %v71, 0.0
  %v74 = vmax.f32 %v72, 0.0
  %76 = vset.pattern.permute.xlu0 0
  %77 = vperm.xlu0 %76, %v50
  %v78 = vpop.permute.xlu0 %77
  %81 = vset.pattern.permute.xlu0 0
  %82 = vperm.xlu0 %81, %v51
  %v83 = vpop.permute.xlu0 %82
  %v85 = vlaneseq
  %v86 = vshrl.u32 %v85, 7
  %v87 = vsub.s32 0, %v86
  %v88 = vrot.slane %v73, %v87
  %v89 = vlaneseq
  %v90 = vshrl.u32 %v89, 7
  %v91 = vsub.s32 0, %v90
  %v92 = vrot.slane %v74, %v91
  %v93 = vmul.f32 %v78, %v88
  %v94 = vmul.f32 %v78, %v92
  %v95 = vmul.f32 %v83, %v88
  %v96 = vmul.f32 %v83, %v92
  %97 = vset.pattern.permute.xlu0 1
  %98 = vperm.xlu0 %97, %v50
  %v99 = vpop.permute.xlu0 %98
  %101 = vset.pattern.permute.xlu0 1
  %102 = vperm.xlu0 %101, %v51
  %v103 = vpop.permute.xlu0 %102
  %v105 = vlaneseq
  %v106 = vshrl.u32 %v105, 7
  %v107 = vsub.s32 1, %v106
  %v108 = vrot.slane %v73, %v107
  %v109 = vlaneseq
  %v110 = vshrl.u32 %v109, 7
  %v111 = vsub.s32 1, %v110
  %v112 = vrot.slane %v74, %v111
  %v113 = vmul.f32 %v99, %v108
  %v114 = vmul.f32 %v99, %v112
  %v115 = vmul.f32 %v103, %v108
  %v116 = vmul.f32 %v103, %v112
  %v117 = vadd.f32 %v93, %v113
  %v118 = vadd.f32 %v94, %v114
  %v119 = vadd.f32 %v95, %v115
  %v120 = vadd.f32 %v96, %v116
  %121 = vset.pattern.permute.xlu0 2
  %122 = vperm.xlu0 %121, %v50
  %v123 = vpop.permute.xlu0 %122
  %125 = vset.pattern.permute.xlu0 2
  %126 = vperm.xlu0 %125, %v51
  %v127 = vpop.permute.xlu0 %126
  %v129 = vlaneseq
  %v130 = vshrl.u32 %v129, 7
  %v131 = vsub.s32 2, %v130
  %v132 = vrot.slane %v73, %v131
  %v133 = vlaneseq
  %v134 = vshrl.u32 %v133, 7
  %v135 = vsub.s32 2, %v134
  %v136 = vrot.slane %v74, %v135
  %v137 = vmul.f32 %v123, %v132
  %v138 = vmul.f32 %v123, %v136
  %v139 = vmul.f32 %v127, %v132
  %v140 = vmul.f32 %v127, %v136
  %v141 = vadd.f32 %v117, %v137
  %v142 = vadd.f32 %v118, %v138
  %v143 = vadd.f32 %v119, %v139
  %v144 = vadd.f32 %v120, %v140
  %145 = vset.pattern.permute.xlu0 3
  %146 = vperm.xlu0 %145, %v50
  %v147 = vpop.permute.xlu0 %146
  %149 = vset.pattern.permute.xlu0 3
  %150 = vperm.xlu0 %149, %v51
  %v151 = vpop.permute.xlu0 %150
  %v153 = vlaneseq
  %v154 = vshrl.u32 %v153, 7
  %v155 = vsub.s32 3, %v154
  %v156 = vrot.slane %v73, %v155
  %v157 = vlaneseq
  %v158 = vshrl.u32 %v157, 7
  %v159 = vsub.s32 3, %v158
  %v160 = vrot.slane %v74, %v159
  %v161 = vmul.f32 %v147, %v156
  %v162 = vmul.f32 %v147, %v160
  %v163 = vmul.f32 %v151, %v156
  %v164 = vmul.f32 %v151, %v160
  %v165 = vadd.f32 %v141, %v161
  %v166 = vadd.f32 %v142, %v162
  %v167 = vadd.f32 %v143, %v163
  %v168 = vadd.f32 %v144, %v164
  %169 = vset.pattern.permute.xlu0 4
  %170 = vperm.xlu0 %169, %v50
  %v171 = vpop.permute.xlu0 %170
  %173 = vset.pattern.permute.xlu0 4
  %174 = vperm.xlu0 %173, %v51
  %v175 = vpop.permute.xlu0 %174
  %v177 = vlaneseq
  %v178 = vshrl.u32 %v177, 7
  %v179 = vsub.s32 4, %v178
  %v180 = vrot.slane %v73, %v179
  %v181 = vlaneseq
  %v182 = vshrl.u32 %v181, 7
  %v183 = vsub.s32 4, %v182
  %v184 = vrot.slane %v74, %v183
  %v185 = vmul.f32 %v171, %v180
  %v186 = vmul.f32 %v171, %v184
  %v187 = vmul.f32 %v175, %v180
  %v188 = vmul.f32 %v175, %v184
  %v189 = vadd.f32 %v165, %v185
  %v190 = vadd.f32 %v166, %v186
  %v191 = vadd.f32 %v167, %v187
  %v192 = vadd.f32 %v168, %v188
  %193 = vset.pattern.permute.xlu0 5
  %194 = vperm.xlu0 %193, %v50
  %v195 = vpop.permute.xlu0 %194
  %197 = vset.pattern.permute.xlu0 5
  %198 = vperm.xlu0 %197, %v51
  %v199 = vpop.permute.xlu0 %198
  %v201 = vlaneseq
  %v202 = vshrl.u32 %v201, 7
  %v203 = vsub.s32 5, %v202
  %v204 = vrot.slane %v73, %v203
  %v205 = vlaneseq
  %v206 = vshrl.u32 %v205, 7
  %v207 = vsub.s32 5, %v206
  %v208 = vrot.slane %v74, %v207
  %v209 = vmul.f32 %v195, %v204
  %v210 = vmul.f32 %v195, %v208
  %v211 = vmul.f32 %v199, %v204
  %v212 = vmul.f32 %v199, %v208
  %v213 = vadd.f32 %v189, %v209
  %v214 = vadd.f32 %v190, %v210
  %v215 = vadd.f32 %v191, %v211
  %v216 = vadd.f32 %v192, %v212
  %217 = vset.pattern.permute.xlu0 6
  %218 = vperm.xlu0 %217, %v50
  %v219 = vpop.permute.xlu0 %218
  %221 = vset.pattern.permute.xlu0 6
  %222 = vperm.xlu0 %221, %v51
  %v223 = vpop.permute.xlu0 %222
  %v225 = vlaneseq
  %v226 = vshrl.u32 %v225, 7
  %v227 = vsub.s32 6, %v226
  %v228 = vrot.slane %v73, %v227
  %v229 = vlaneseq
  %v230 = vshrl.u32 %v229, 7
  %v231 = vsub.s32 6, %v230
  %v232 = vrot.slane %v74, %v231
  %v233 = vmul.f32 %v219, %v228
  %v234 = vmul.f32 %v219, %v232
  %v235 = vmul.f32 %v223, %v228
  %v236 = vmul.f32 %v223, %v232
  %v237 = vadd.f32 %v213, %v233
  %v238 = vadd.f32 %v214, %v234
  %v239 = vadd.f32 %v215, %v235
  %v240 = vadd.f32 %v216, %v236
  %241 = vset.pattern.permute.xlu0 7
  %242 = vperm.xlu0 %241, %v50
  %v243 = vpop.permute.xlu0 %242
  %245 = vset.pattern.permute.xlu0 7
  %246 = vperm.xlu0 %245, %v51
  %v247 = vpop.permute.xlu0 %246
  %v249 = vlaneseq
  %v250 = vshrl.u32 %v249, 7
  %v251 = vsub.s32 7, %v250
  %v252 = vrot.slane %v73, %v251
  %v253 = vlaneseq
  %v254 = vshrl.u32 %v253, 7
  %v255 = vsub.s32 7, %v254
  %v256 = vrot.slane %v74, %v255
  %v257 = vmul.f32 %v243, %v252
  %v258 = vmul.f32 %v243, %v256
  %v259 = vmul.f32 %v247, %v252
  %v260 = vmul.f32 %v247, %v256
  %v261 = vadd.f32 %v237, %v257
  %v262 = vadd.f32 %v238, %v258
  %v263 = vadd.f32 %v239, %v259
  %v264 = vadd.f32 %v240, %v260
  %266 = vset.pattern.permute.xlu0 0
  %267 = vperm.xlu0 %266, %v52
  %v268 = vpop.permute.xlu0 %267
  %271 = vset.pattern.permute.xlu0 0
  %272 = vperm.xlu0 %271, %v53
  %v273 = vpop.permute.xlu0 %272
  %v275 = vadd.f32 %v261, %v268
  %v276 = vadd.f32 %v262, %v268
  %v277 = vadd.f32 %v263, %v273
  %v278 = vadd.f32 %v264, %v273
  %v279 = vld [vmem:[%s8] sm:$0xff]
  %v280 = vld [vmem:[%s8 + $0x8] sm:$0xff]
  %v281 = vadd.f32 %v279, 0.001
  %v282 = vadd.f32 %v280, 0.001
  %v283 = vrsqrt.pop %v281
  %v284 = vrsqrt.pop %v282
  %v285 = vld [vmem:[%s9] sm:$0xff]
  %v286 = vld [vmem:[%s9 + $0x8] sm:$0xff]
  %v287 = vmul.f32 %v283, %v285
  %v288 = vmul.f32 %v284, %v286
  %v289 = vld [vmem:[%s10] sm:$0xff]
  %v290 = vld [vmem:[%s10 + $0x8] sm:$0xff]
  %v291 = vld [vmem:[%s7] sm:$0xff]
  %v292 = vld [vmem:[%s7 + $0x8] sm:$0xff]
  %v293 = vmul.f32 %v291, %v287
  %v294 = vmul.f32 %v292, %v288
  %v295 = vsub.f32 %v289, %v293
  %v296 = vsub.f32 %v290, %v294
  %298 = vset.pattern.permute.xlu0 0
  %299 = vperm.xlu0 %298, %v287
  %v300 = vpop.permute.xlu0 %299
  %303 = vset.pattern.permute.xlu0 0
  %304 = vperm.xlu0 %303, %v288
  %v305 = vpop.permute.xlu0 %304
  %v307 = vmul.f32 %v275, %v300
  %v308 = vmul.f32 %v276, %v300
  %v309 = vmul.f32 %v277, %v305
  %v310 = vmul.f32 %v278, %v305
  %312 = vset.pattern.permute.xlu0 0
  %313 = vperm.xlu0 %312, %v295
  %v314 = vpop.permute.xlu0 %313
  %317 = vset.pattern.permute.xlu0 0
  %318 = vperm.xlu0 %317, %v296
  %v319 = vpop.permute.xlu0 %318
  %v321 = vadd.f32 %v307, %v314
  %v322 = vadd.f32 %v308, %v314
  %v323 = vadd.f32 %v309, %v319
  %v324 = vadd.f32 %v310, %v319
  %v325 = vmax.f32 %v321, 0.0
  %v326 = vmax.f32 %v322, 0.0
  %v327 = vmax.f32 %v323, 0.0
  %v328 = vmax.f32 %v324, 0.0
  %v329 = vld [vmem:[%s11] sm:$0xff]
  %v330 = vld [vmem:[%s11 + $0x8] sm:$0xff]
  %332 = vset.pattern.permute.xlu0 0
  %333 = vperm.xlu0 %332, %v329
  %v334 = vpop.permute.xlu0 %333
  %337 = vset.pattern.permute.xlu0 0
  %338 = vperm.xlu0 %337, %v330
  %v339 = vpop.permute.xlu0 %338
  %v341 = vlaneseq
  %v342 = vshrl.u32 %v341, 7
  %v343 = vsub.s32 0, %v342
  %v344 = vrot.slane %v325, %v343
  %v345 = vlaneseq
  %v346 = vshrl.u32 %v345, 7
  %v347 = vsub.s32 0, %v346
  %v348 = vrot.slane %v326, %v347
  %v349 = vmul.f32 %v334, %v344
  %v350 = vmul.f32 %v334, %v348
  %v351 = vmul.f32 %v339, %v344
  %v352 = vmul.f32 %v339, %v348
  %353 = vset.pattern.permute.xlu0 1
  %354 = vperm.xlu0 %353, %v329
  %v355 = vpop.permute.xlu0 %354
  %357 = vset.pattern.permute.xlu0 1
  %358 = vperm.xlu0 %357, %v330
  %v359 = vpop.permute.xlu0 %358
  %v361 = vlaneseq
  %v362 = vshrl.u32 %v361, 7
  %v363 = vsub.s32 1, %v362
  %v364 = vrot.slane %v325, %v363
  %v365 = vlaneseq
  %v366 = vshrl.u32 %v365, 7
  %v367 = vsub.s32 1, %v366
  %v368 = vrot.slane %v326, %v367
  %v369 = vmul.f32 %v355, %v364
  %v370 = vmul.f32 %v355, %v368
  %v371 = vmul.f32 %v359, %v364
  %v372 = vmul.f32 %v359, %v368
  %v373 = vadd.f32 %v349, %v369
  %v374 = vadd.f32 %v350, %v370
  %v375 = vadd.f32 %v351, %v371
  %v376 = vadd.f32 %v352, %v372
  %377 = vset.pattern.permute.xlu0 2
  %378 = vperm.xlu0 %377, %v329
  %v379 = vpop.permute.xlu0 %378
  %381 = vset.pattern.permute.xlu0 2
  %382 = vperm.xlu0 %381, %v330
  %v383 = vpop.permute.xlu0 %382
  %v385 = vlaneseq
  %v386 = vshrl.u32 %v385, 7
  %v387 = vsub.s32 2, %v386
  %v388 = vrot.slane %v325, %v387
  %v389 = vlaneseq
  %v390 = vshrl.u32 %v389, 7
  %v391 = vsub.s32 2, %v390
  %v392 = vrot.slane %v326, %v391
  %v393 = vmul.f32 %v379, %v388
  %v394 = vmul.f32 %v379, %v392
  %v395 = vmul.f32 %v383, %v388
  %v396 = vmul.f32 %v383, %v392
  %v397 = vadd.f32 %v373, %v393
  %v398 = vadd.f32 %v374, %v394
  %v399 = vadd.f32 %v375, %v395
  %v400 = vadd.f32 %v376, %v396
  %401 = vset.pattern.permute.xlu0 3
  %402 = vperm.xlu0 %401, %v329
  %v403 = vpop.permute.xlu0 %402
  %405 = vset.pattern.permute.xlu0 3
  %406 = vperm.xlu0 %405, %v330
  %v407 = vpop.permute.xlu0 %406
  %v409 = vlaneseq
  %v410 = vshrl.u32 %v409, 7
  %v411 = vsub.s32 3, %v410
  %v412 = vrot.slane %v325, %v411
  %v413 = vlaneseq
  %v414 = vshrl.u32 %v413, 7
  %v415 = vsub.s32 3, %v414
  %v416 = vrot.slane %v326, %v415
  %v417 = vmul.f32 %v403, %v412
  %v418 = vmul.f32 %v403, %v416
  %v419 = vmul.f32 %v407, %v412
  %v420 = vmul.f32 %v407, %v416
  %v421 = vadd.f32 %v397, %v417
  %v422 = vadd.f32 %v398, %v418
  %v423 = vadd.f32 %v399, %v419
  %v424 = vadd.f32 %v400, %v420
  %425 = vset.pattern.permute.xlu0 4
  %426 = vperm.xlu0 %425, %v329
  %v427 = vpop.permute.xlu0 %426
  %429 = vset.pattern.permute.xlu0 4
  %430 = vperm.xlu0 %429, %v330
  %v431 = vpop.permute.xlu0 %430
  %v433 = vlaneseq
  %v434 = vshrl.u32 %v433, 7
  %v435 = vsub.s32 4, %v434
  %v436 = vrot.slane %v325, %v435
  %v437 = vlaneseq
  %v438 = vshrl.u32 %v437, 7
  %v439 = vsub.s32 4, %v438
  %v440 = vrot.slane %v326, %v439
  %v441 = vmul.f32 %v427, %v436
  %v442 = vmul.f32 %v427, %v440
  %v443 = vmul.f32 %v431, %v436
  %v444 = vmul.f32 %v431, %v440
  %v445 = vadd.f32 %v421, %v441
  %v446 = vadd.f32 %v422, %v442
  %v447 = vadd.f32 %v423, %v443
  %v448 = vadd.f32 %v424, %v444
  %449 = vset.pattern.permute.xlu0 5
  %450 = vperm.xlu0 %449, %v329
  %v451 = vpop.permute.xlu0 %450
  %453 = vset.pattern.permute.xlu0 5
  %454 = vperm.xlu0 %453, %v330
  %v455 = vpop.permute.xlu0 %454
  %v457 = vlaneseq
  %v458 = vshrl.u32 %v457, 7
  %v459 = vsub.s32 5, %v458
  %v460 = vrot.slane %v325, %v459
  %v461 = vlaneseq
  %v462 = vshrl.u32 %v461, 7
  %v463 = vsub.s32 5, %v462
  %v464 = vrot.slane %v326, %v463
  %v465 = vmul.f32 %v451, %v460
  %v466 = vmul.f32 %v451, %v464
  %v467 = vmul.f32 %v455, %v460
  %v468 = vmul.f32 %v455, %v464
  %v469 = vadd.f32 %v445, %v465
  %v470 = vadd.f32 %v446, %v466
  %v471 = vadd.f32 %v447, %v467
  %v472 = vadd.f32 %v448, %v468
  %473 = vset.pattern.permute.xlu0 6
  %474 = vperm.xlu0 %473, %v329
  %v475 = vpop.permute.xlu0 %474
  %477 = vset.pattern.permute.xlu0 6
  %478 = vperm.xlu0 %477, %v330
  %v479 = vpop.permute.xlu0 %478
  %v481 = vlaneseq
  %v482 = vshrl.u32 %v481, 7
  %v483 = vsub.s32 6, %v482
  %v484 = vrot.slane %v325, %v483
  %v485 = vlaneseq
  %v486 = vshrl.u32 %v485, 7
  %v487 = vsub.s32 6, %v486
  %v488 = vrot.slane %v326, %v487
  %v489 = vmul.f32 %v475, %v484
  %v490 = vmul.f32 %v475, %v488
  %v491 = vmul.f32 %v479, %v484
  %v492 = vmul.f32 %v479, %v488
  %v493 = vadd.f32 %v469, %v489
  %v494 = vadd.f32 %v470, %v490
  %v495 = vadd.f32 %v471, %v491
  %v496 = vadd.f32 %v472, %v492
  %497 = vset.pattern.permute.xlu0 7
  %498 = vperm.xlu0 %497, %v329
  %v499 = vpop.permute.xlu0 %498
  %501 = vset.pattern.permute.xlu0 7
  %502 = vperm.xlu0 %501, %v330
  %v503 = vpop.permute.xlu0 %502
  %v505 = vlaneseq
  %v506 = vshrl.u32 %v505, 7
  %v507 = vsub.s32 7, %v506
  %v508 = vrot.slane %v325, %v507
  %v509 = vlaneseq
  %v510 = vshrl.u32 %v509, 7
  %v511 = vsub.s32 7, %v510
  %v512 = vrot.slane %v326, %v511
  %v513 = vmul.f32 %v499, %v508
  %v514 = vmul.f32 %v499, %v512
  %v515 = vmul.f32 %v503, %v508
  %v516 = vmul.f32 %v503, %v512
  %v517 = vadd.f32 %v493, %v513
  %v518 = vadd.f32 %v494, %v514
  %v519 = vadd.f32 %v495, %v515
  %v520 = vadd.f32 %v496, %v516
  %521 = vset.pattern.permute.xlu0 8
  %522 = vperm.xlu0 %521, %v329
  %v523 = vpop.permute.xlu0 %522
  %525 = vset.pattern.permute.xlu0 8
  %526 = vperm.xlu0 %525, %v330
  %v527 = vpop.permute.xlu0 %526
  %v529 = vlaneseq
  %v530 = vshrl.u32 %v529, 7
  %v531 = vsub.s32 0, %v530
  %v532 = vrot.slane %v327, %v531
  %v533 = vlaneseq
  %v534 = vshrl.u32 %v533, 7
  %v535 = vsub.s32 0, %v534
  %v536 = vrot.slane %v328, %v535
  %v537 = vmul.f32 %v523, %v532
  %v538 = vmul.f32 %v523, %v536
  %v539 = vmul.f32 %v527, %v532
  %v540 = vmul.f32 %v527, %v536
  %v541 = vadd.f32 %v517, %v537
  %v542 = vadd.f32 %v518, %v538
  %v543 = vadd.f32 %v519, %v539
  %v544 = vadd.f32 %v520, %v540
  %545 = vset.pattern.permute.xlu0 9
  %546 = vperm.xlu0 %545, %v329
  %v547 = vpop.permute.xlu0 %546
  %549 = vset.pattern.permute.xlu0 9
  %550 = vperm.xlu0 %549, %v330
  %v551 = vpop.permute.xlu0 %550
  %v553 = vlaneseq
  %v554 = vshrl.u32 %v553, 7
  %v555 = vsub.s32 1, %v554
  %v556 = vrot.slane %v327, %v555
  %v557 = vlaneseq
  %v558 = vshrl.u32 %v557, 7
  %v559 = vsub.s32 1, %v558
  %v560 = vrot.slane %v328, %v559
  %v561 = vmul.f32 %v547, %v556
  %v562 = vmul.f32 %v547, %v560
  %v563 = vmul.f32 %v551, %v556
  %v564 = vmul.f32 %v551, %v560
  %v565 = vadd.f32 %v541, %v561
  %v566 = vadd.f32 %v542, %v562
  %v567 = vadd.f32 %v543, %v563
  %v568 = vadd.f32 %v544, %v564
  %569 = vset.pattern.permute.xlu0 10
  %570 = vperm.xlu0 %569, %v329
  %v571 = vpop.permute.xlu0 %570
  %573 = vset.pattern.permute.xlu0 10
  %574 = vperm.xlu0 %573, %v330
  %v575 = vpop.permute.xlu0 %574
  %v577 = vlaneseq
  %v578 = vshrl.u32 %v577, 7
  %v579 = vsub.s32 2, %v578
  %v580 = vrot.slane %v327, %v579
  %v581 = vlaneseq
  %v582 = vshrl.u32 %v581, 7
  %v583 = vsub.s32 2, %v582
  %v584 = vrot.slane %v328, %v583
  %v585 = vmul.f32 %v571, %v580
  %v586 = vmul.f32 %v571, %v584
  %v587 = vmul.f32 %v575, %v580
  %v588 = vmul.f32 %v575, %v584
  %v589 = vadd.f32 %v565, %v585
  %v590 = vadd.f32 %v566, %v586
  %v591 = vadd.f32 %v567, %v587
  %v592 = vadd.f32 %v568, %v588
  %593 = vset.pattern.permute.xlu0 11
  %594 = vperm.xlu0 %593, %v329
  %v595 = vpop.permute.xlu0 %594
  %597 = vset.pattern.permute.xlu0 11
  %598 = vperm.xlu0 %597, %v330
  %v599 = vpop.permute.xlu0 %598
  %v601 = vlaneseq
  %v602 = vshrl.u32 %v601, 7
  %v603 = vsub.s32 3, %v602
  %v604 = vrot.slane %v327, %v603
  %v605 = vlaneseq
  %v606 = vshrl.u32 %v605, 7
  %v607 = vsub.s32 3, %v606
  %v608 = vrot.slane %v328, %v607
  %v609 = vmul.f32 %v595, %v604
  %v610 = vmul.f32 %v595, %v608
  %v611 = vmul.f32 %v599, %v604
  %v612 = vmul.f32 %v599, %v608
  %v613 = vadd.f32 %v589, %v609
  %v614 = vadd.f32 %v590, %v610
  %v615 = vadd.f32 %v591, %v611
  %v616 = vadd.f32 %v592, %v612
  %617 = vset.pattern.permute.xlu0 12
  %618 = vperm.xlu0 %617, %v329
  %v619 = vpop.permute.xlu0 %618
  %621 = vset.pattern.permute.xlu0 12
  %622 = vperm.xlu0 %621, %v330
  %v623 = vpop.permute.xlu0 %622
  %v625 = vlaneseq
  %v626 = vshrl.u32 %v625, 7
  %v627 = vsub.s32 4, %v626
  %v628 = vrot.slane %v327, %v627
  %v629 = vlaneseq
  %v630 = vshrl.u32 %v629, 7
  %v631 = vsub.s32 4, %v630
  %v632 = vrot.slane %v328, %v631
  %v633 = vmul.f32 %v619, %v628
  %v634 = vmul.f32 %v619, %v632
  %v635 = vmul.f32 %v623, %v628
  %v636 = vmul.f32 %v623, %v632
  %v637 = vadd.f32 %v613, %v633
  %v638 = vadd.f32 %v614, %v634
  %v639 = vadd.f32 %v615, %v635
  %v640 = vadd.f32 %v616, %v636
  %641 = vset.pattern.permute.xlu0 13
  %642 = vperm.xlu0 %641, %v329
  %v643 = vpop.permute.xlu0 %642
  %645 = vset.pattern.permute.xlu0 13
  %646 = vperm.xlu0 %645, %v330
  %v647 = vpop.permute.xlu0 %646
  %v649 = vlaneseq
  %v650 = vshrl.u32 %v649, 7
  %v651 = vsub.s32 5, %v650
  %v652 = vrot.slane %v327, %v651
  %v653 = vlaneseq
  %v654 = vshrl.u32 %v653, 7
  %v655 = vsub.s32 5, %v654
  %v656 = vrot.slane %v328, %v655
  %v657 = vmul.f32 %v643, %v652
  %v658 = vmul.f32 %v643, %v656
  %v659 = vmul.f32 %v647, %v652
  %v660 = vmul.f32 %v647, %v656
  %v661 = vadd.f32 %v637, %v657
  %v662 = vadd.f32 %v638, %v658
  %v663 = vadd.f32 %v639, %v659
  %v664 = vadd.f32 %v640, %v660
  %665 = vset.pattern.permute.xlu0 14
  %666 = vperm.xlu0 %665, %v329
  %v667 = vpop.permute.xlu0 %666
  %669 = vset.pattern.permute.xlu0 14
  %670 = vperm.xlu0 %669, %v330
  %v671 = vpop.permute.xlu0 %670
  %v673 = vlaneseq
  %v674 = vshrl.u32 %v673, 7
  %v675 = vsub.s32 6, %v674
  %v676 = vrot.slane %v327, %v675
  %v677 = vlaneseq
  %v678 = vshrl.u32 %v677, 7
  %v679 = vsub.s32 6, %v678
  %v680 = vrot.slane %v328, %v679
  %v681 = vmul.f32 %v667, %v676
  %v682 = vmul.f32 %v667, %v680
  %v683 = vmul.f32 %v671, %v676
  %v684 = vmul.f32 %v671, %v680
  %v685 = vadd.f32 %v661, %v681
  %v686 = vadd.f32 %v662, %v682
  %v687 = vadd.f32 %v663, %v683
  %v688 = vadd.f32 %v664, %v684
  %689 = vset.pattern.permute.xlu0 15
  %690 = vperm.xlu0 %689, %v329
  %v691 = vpop.permute.xlu0 %690
  %693 = vset.pattern.permute.xlu0 15
  %694 = vperm.xlu0 %693, %v330
  %v695 = vpop.permute.xlu0 %694
  %v697 = vlaneseq
  %v698 = vshrl.u32 %v697, 7
  %v699 = vsub.s32 7, %v698
  %v700 = vrot.slane %v327, %v699
  %v701 = vlaneseq
  %v702 = vshrl.u32 %v701, 7
  %v703 = vsub.s32 7, %v702
  %v704 = vrot.slane %v328, %v703
  %v705 = vmul.f32 %v691, %v700
  %v706 = vmul.f32 %v691, %v704
  %v707 = vmul.f32 %v695, %v700
  %v708 = vmul.f32 %v695, %v704
  %v709 = vadd.f32 %v685, %v705
  %v710 = vadd.f32 %v686, %v706
  %v711 = vadd.f32 %v687, %v707
  %v712 = vadd.f32 %v688, %v708
  %713 = vset.pattern.permute.xlu0 16
  %714 = vperm.xlu0 %713, %v329
  %v715 = vpop.permute.xlu0 %714
  %717 = vset.pattern.permute.xlu0 16
  %718 = vperm.xlu0 %717, %v330
  %v719 = vpop.permute.xlu0 %718
  %v721 = vlaneseq
  %v722 = vshrl.u32 %v721, 7
  %v723 = vsub.s32 0, %v722
  %v724 = vrot.slane %v44, %v723
  %v725 = vlaneseq
  %v726 = vshrl.u32 %v725, 7
  %v727 = vsub.s32 0, %v726
  %v728 = vrot.slane %v45, %v727
  %v729 = vmul.f32 %v715, %v724
  %v730 = vmul.f32 %v715, %v728
  %v731 = vmul.f32 %v719, %v724
  %v732 = vmul.f32 %v719, %v728
  %733 = vset.pattern.permute.xlu0 17
  %734 = vperm.xlu0 %733, %v329
  %v735 = vpop.permute.xlu0 %734
  %737 = vset.pattern.permute.xlu0 17
  %738 = vperm.xlu0 %737, %v330
  %v739 = vpop.permute.xlu0 %738
  %v741 = vlaneseq
  %v742 = vshrl.u32 %v741, 7
  %v743 = vsub.s32 1, %v742
  %v744 = vrot.slane %v44, %v743
  %v745 = vlaneseq
  %v746 = vshrl.u32 %v745, 7
  %v747 = vsub.s32 1, %v746
  %v748 = vrot.slane %v45, %v747
  %v749 = vmul.f32 %v735, %v744
  %v750 = vmul.f32 %v735, %v748
  %v751 = vmul.f32 %v739, %v744
  %v752 = vmul.f32 %v739, %v748
  %v753 = vadd.f32 %v729, %v749
  %v754 = vadd.f32 %v730, %v750
  %v755 = vadd.f32 %v731, %v751
  %v756 = vadd.f32 %v732, %v752
  %757 = vset.pattern.permute.xlu0 18
  %758 = vperm.xlu0 %757, %v329
  %v759 = vpop.permute.xlu0 %758
  %761 = vset.pattern.permute.xlu0 18
  %762 = vperm.xlu0 %761, %v330
  %v763 = vpop.permute.xlu0 %762
  %v765 = vlaneseq
  %v766 = vshrl.u32 %v765, 7
  %v767 = vsub.s32 2, %v766
  %v768 = vrot.slane %v44, %v767
  %v769 = vlaneseq
  %v770 = vshrl.u32 %v769, 7
  %v771 = vsub.s32 2, %v770
  %v772 = vrot.slane %v45, %v771
  %v773 = vmul.f32 %v759, %v768
  %v774 = vmul.f32 %v759, %v772
  %v775 = vmul.f32 %v763, %v768
  %v776 = vmul.f32 %v763, %v772
  %v777 = vadd.f32 %v753, %v773
  %v778 = vadd.f32 %v754, %v774
  %v779 = vadd.f32 %v755, %v775
  %v780 = vadd.f32 %v756, %v776
  %781 = vset.pattern.permute.xlu0 19
  %782 = vperm.xlu0 %781, %v329
  %v783 = vpop.permute.xlu0 %782
  %785 = vset.pattern.permute.xlu0 19
  %786 = vperm.xlu0 %785, %v330
  %v787 = vpop.permute.xlu0 %786
  %v789 = vlaneseq
  %v790 = vshrl.u32 %v789, 7
  %v791 = vsub.s32 3, %v790
  %v792 = vrot.slane %v44, %v791
  %v793 = vlaneseq
  %v794 = vshrl.u32 %v793, 7
  %v795 = vsub.s32 3, %v794
  %v796 = vrot.slane %v45, %v795
  %v797 = vmul.f32 %v783, %v792
  %v798 = vmul.f32 %v783, %v796
  %v799 = vmul.f32 %v787, %v792
  %v800 = vmul.f32 %v787, %v796
  %v801 = vadd.f32 %v777, %v797
  %v802 = vadd.f32 %v778, %v798
  %v803 = vadd.f32 %v779, %v799
  %v804 = vadd.f32 %v780, %v800
  %805 = vset.pattern.permute.xlu0 20
  %806 = vperm.xlu0 %805, %v329
  %v807 = vpop.permute.xlu0 %806
  %809 = vset.pattern.permute.xlu0 20
  %810 = vperm.xlu0 %809, %v330
  %v811 = vpop.permute.xlu0 %810
  %v813 = vlaneseq
  %v814 = vshrl.u32 %v813, 7
  %v815 = vsub.s32 4, %v814
  %v816 = vrot.slane %v44, %v815
  %v817 = vlaneseq
  %v818 = vshrl.u32 %v817, 7
  %v819 = vsub.s32 4, %v818
  %v820 = vrot.slane %v45, %v819
  %v821 = vmul.f32 %v807, %v816
  %v822 = vmul.f32 %v807, %v820
  %v823 = vmul.f32 %v811, %v816
  %v824 = vmul.f32 %v811, %v820
  %v825 = vadd.f32 %v801, %v821
  %v826 = vadd.f32 %v802, %v822
  %v827 = vadd.f32 %v803, %v823
  %v828 = vadd.f32 %v804, %v824
  %829 = vset.pattern.permute.xlu0 21
  %830 = vperm.xlu0 %829, %v329
  %v831 = vpop.permute.xlu0 %830
  %833 = vset.pattern.permute.xlu0 21
  %834 = vperm.xlu0 %833, %v330
  %v835 = vpop.permute.xlu0 %834
  %v837 = vlaneseq
  %v838 = vshrl.u32 %v837, 7
  %v839 = vsub.s32 5, %v838
  %v840 = vrot.slane %v44, %v839
  %v841 = vlaneseq
  %v842 = vshrl.u32 %v841, 7
  %v843 = vsub.s32 5, %v842
  %v844 = vrot.slane %v45, %v843
  %v845 = vmul.f32 %v831, %v840
  %v846 = vmul.f32 %v831, %v844
  %v847 = vmul.f32 %v835, %v840
  %v848 = vmul.f32 %v835, %v844
  %v849 = vadd.f32 %v825, %v845
  %v850 = vadd.f32 %v826, %v846
  %v851 = vadd.f32 %v827, %v847
  %v852 = vadd.f32 %v828, %v848
  %853 = vset.pattern.permute.xlu0 22
  %854 = vperm.xlu0 %853, %v329
  %v855 = vpop.permute.xlu0 %854
  %857 = vset.pattern.permute.xlu0 22
  %858 = vperm.xlu0 %857, %v330
  %v859 = vpop.permute.xlu0 %858
  %v861 = vlaneseq
  %v862 = vshrl.u32 %v861, 7
  %v863 = vsub.s32 6, %v862
  %v864 = vrot.slane %v44, %v863
  %v865 = vlaneseq
  %v866 = vshrl.u32 %v865, 7
  %v867 = vsub.s32 6, %v866
  %v868 = vrot.slane %v45, %v867
  %v869 = vmul.f32 %v855, %v864
  %v870 = vmul.f32 %v855, %v868
  %v871 = vmul.f32 %v859, %v864
  %v872 = vmul.f32 %v859, %v868
  %v873 = vadd.f32 %v849, %v869
  %v874 = vadd.f32 %v850, %v870
  %v875 = vadd.f32 %v851, %v871
  %v876 = vadd.f32 %v852, %v872
  %877 = vset.pattern.permute.xlu0 23
  %878 = vperm.xlu0 %877, %v329
  %v879 = vpop.permute.xlu0 %878
  %881 = vset.pattern.permute.xlu0 23
  %882 = vperm.xlu0 %881, %v330
  %v883 = vpop.permute.xlu0 %882
  %v885 = vlaneseq
  %v886 = vshrl.u32 %v885, 7
  %v887 = vsub.s32 7, %v886
  %v888 = vrot.slane %v44, %v887
  %v889 = vlaneseq
  %v890 = vshrl.u32 %v889, 7
  %v891 = vsub.s32 7, %v890
  %v892 = vrot.slane %v45, %v891
  %v893 = vmul.f32 %v879, %v888
  %v894 = vmul.f32 %v879, %v892
  %v895 = vmul.f32 %v883, %v888
  %v896 = vmul.f32 %v883, %v892
  %v897 = vadd.f32 %v873, %v893
  %v898 = vadd.f32 %v874, %v894
  %v899 = vadd.f32 %v875, %v895
  %v900 = vadd.f32 %v876, %v896
  %v901 = vadd.f32 %v709, %v897
  %v902 = vadd.f32 %v710, %v898
  %v903 = vadd.f32 %v711, %v899
  %v904 = vadd.f32 %v712, %v900
  %v905 = vld [vmem:[%s12] sm:$0xff]
  %v906 = vld [vmem:[%s12 + $0x8] sm:$0xff]
  %908 = vset.pattern.permute.xlu0 0
  %909 = vperm.xlu0 %908, %v905
  %v910 = vpop.permute.xlu0 %909
  %913 = vset.pattern.permute.xlu0 0
  %914 = vperm.xlu0 %913, %v906
  %v915 = vpop.permute.xlu0 %914
  %v917 = vadd.f32 %v901, %v910
  %v918 = vadd.f32 %v902, %v910
  %v919 = vadd.f32 %v903, %v915
  %v920 = vadd.f32 %v904, %v915
  %921 = vst [vmem:[%s13] sm:$0xff] %v917
  %922 = vst [vmem:[%s13 + $0x8] sm:$0xff] %v918
  %923 = vst [vmem:[%s13 + $0x10] sm:$0xff] %v919
  %924 = vst [vmem:[%s13 + $0x18] sm:$0xff] %v920
  // Predicated region
  $region54: #{pointcn_forward.5} parent=0 // pred_check
    _
  $region55: #{pointcn_forward.5} parent=0 // pred_check_branch
    %926 = sbr.rel (0) target = $region57
  $region56: #{pointcn_forward.5} parent=0 // pred_region
    _
  $region57: #{pointcn_forward.5} parent=0 // pred_fallthru
    _
  // Predicated region
  $region58: #{pointcn_forward.5} parent=0 // pred_check
    _
  $region59: #{pointcn_forward.5} parent=0 // pred_check_branch
    %928 = sbr.rel (0) target = $region61
  $region60: #{pointcn_forward.5} parent=0 // pred_region
    _
  $region61: #{pointcn_forward.5} parent=0 // pred_fallthru
    _

</llo_original>
